<compile_context>
chip_gen: v5e
topology: v5e:2x2
jax: 0.10.0
libtpu: 0.0.40
codegen_flags: <defaults>
</compile_context>

<pallas_src>
import math

import numpy as np
import jax
import jax.numpy as jnp
from jax.experimental import pallas as pl
from jax.experimental.pallas import tpu as pltpu

# Small, TPU-friendly problem sizes consistent with the module's signature.
B, S, D = 2, 8, 128          # batch, seq, d_model
H = 8                        # num_heads (module default)
HD = D // H                  # head dim
DFF = 256                    # d_ff (module allows passing it)
N = B * S                    # collapsed token count
EPS = 1e-5                   # nn.LayerNorm default eps
ROPE_THETA = 10000.0
NEG_INF = -1e30

# Feature permutation: interleaved order (x0,x1,x2,x3,...) -> split order (evens|odds).
# In split order, rotate_half() becomes a half-length lane rotation.
_PERM = np.concatenate([np.arange(0, D, 2), np.arange(1, D, 2)])
_INV_PERM = np.argsort(_PERM)


# ----------------------------- Pallas kernel --------------------------------
def encoder_layer_kernel(
    x_ref, cos_ref, sin_ref, mask_ref,
    wqk_ref, bqk_ref, wv_ref, bv_ref, wo3_ref, bo_ref,
    g1_ref, be1_ref, w1_ref, b1_ref, w2_ref, b2_ref, g2_ref, be2_ref,
    out_ref,
):
  """Single grid step over the whole collapsed (B*S, D) batch.

  All feature-dimension data is in "split" order (evens|odds); weights / LN params
  were permuted accordingly in the wrapper, so the math is identical to the module.
  """
  x = x_ref[...]                                           # (N, D) f32

  # --- interleaved RoPE in split layout: one lane half-rotation, signs folded in sin.
  x_half = pltpu.roll(x, D // 2, axis=1)
  qk = x * cos_ref[...] + x_half * sin_ref[...]

  # --- fused Q|K projection (256-wide output) + V projection; bf16 weights, f32 acc.
  #     1/sqrt(HD) is already folded into the Q half of the weights/bias.
  qkp = jnp.dot(qk.astype(jnp.bfloat16), wqk_ref[...],
                preferred_element_type=jnp.float32) + bqk_ref[...]    # (N, 2D)
  v = jnp.dot(x.astype(jnp.bfloat16), wv_ref[...],
              preferred_element_type=jnp.float32) + bv_ref[...]       # (N, D)

  # --- head split without lane-dim reshapes: one 2-D transpose, then tile-aligned
  #     sublane splits (free).  q additionally gets a minor-dims swap so both attention
  #     contractions are standard / rhs-transposed batched matmuls.
  qkpT = qkp.T                                             # (2D, N)
  q3 = qkpT[:D].reshape(H, HD, N)                          # (H, HD, N)
  k3 = qkpT[D:].reshape(H, HD, N)                          # (H, HD, N)
  v3 = v.T.reshape(H, HD, N)                               # (H, HD, N)
  qh = jnp.transpose(q3, (0, 2, 1))                        # (H, N, HD)

  # --- all heads in one batched contraction (no per-head loop).
  s = jnp.einsum('hqd,hdk->hqk', qh, k3,
                 preferred_element_type=jnp.float32)       # (H, N, N)
  s = s + mask_ref[...]                                    # block-diag: keep batches apart
  s = s - jnp.max(s, axis=-1, keepdims=True)
  p = jnp.exp(s)
  p = p * pl.reciprocal(jnp.sum(p, axis=-1, keepdims=True), approx=True)
  o = jnp.einsum('hqk,hdk->hqd', p, v3,
                 preferred_element_type=jnp.float32)       # (H, N, HD)

  # --- output projection with head-blocked weights: batched matmul + sum over heads
  #     (avoids merging heads back into the lane dimension).
  attn = jnp.einsum('hqd,hdm->hqm', o.astype(jnp.bfloat16), wo3_ref[...],
                    preferred_element_type=jnp.float32)    # (H, N, D)
  attn = jnp.sum(attn, axis=0) + bo_ref[...]               # (N, D)

  def layer_norm(y, g, b):
    mu = jnp.mean(y, axis=-1, keepdims=True)
    var = jnp.mean(jnp.square(y - mu), axis=-1, keepdims=True)
    return (y - mu) * jax.lax.rsqrt(var + EPS) * g + b

  # dropout -> identity (eval-mode semantics)
  h1 = layer_norm(x + attn, g1_ref[...], be1_ref[...])

  ff = jnp.dot(h1.astype(jnp.bfloat16), w1_ref[...],
               preferred_element_type=jnp.float32) + b1_ref[...]
  ff = jnp.maximum(ff, 0.0)
  ff = jnp.dot(ff.astype(jnp.bfloat16), w2_ref[...],
               preferred_element_type=jnp.float32) + b2_ref[...]

  out_ref[...] = layer_norm(h1 + ff, g2_ref[...], be2_ref[...])


# ------------------------------ JAX wrapper ----------------------------------
def _full_spec(a):
  zeros = (0,) * a.ndim
  return pl.BlockSpec(a.shape, lambda i: zeros)


def _split_rope_tables():
  """cos/sin tables in split feature order; rotate_half signs folded into sin."""
  inv = 1.0 / (ROPE_THETA ** (np.arange(0, D, 2, dtype=np.float32) / D))
  freqs = np.arange(S, dtype=np.float32)[:, None] * inv[None, :]      # (S, D/2)
  cos_h, sin_h = np.cos(freqs), np.sin(freqs)
  cos_t = np.concatenate([cos_h, cos_h], axis=-1)                     # (S, D)
  sin_t = np.concatenate([-sin_h, sin_h], axis=-1)                    # (S, D), signed
  return (jnp.asarray(np.tile(cos_t, (B, 1))),                        # (N, D)
          jnp.asarray(np.tile(sin_t, (B, 1))))


def prepare_kernel_params(params):
  """Permute weights to split feature order, fuse Q|K, fold scale, cast to bf16."""
  (wq, bq, wk, bk, wv, bv, wo, bo, g1, be1, w1, b1, w2, b2, g2, be2) = params
  scale = 1.0 / math.sqrt(HD)
  perm = _PERM
  bf16 = lambda a: a.astype(jnp.bfloat16)
  w_qk = jnp.concatenate([wq * scale, wk], axis=1)[perm, :]           # (D, 2D)
  b_qk = jnp.concatenate([bq * scale, bk], axis=1)                    # (1, 2D)
  return (
      bf16(w_qk), b_qk,
      bf16(wv[perm, :]), bv,
      bf16(wo[:, perm].reshape(H, HD, D)), bo[:, perm],
      g1[:, perm], be1[:, perm],
      bf16(w1[perm, :]), b1,
      bf16(w2[:, perm]), b2[:, perm],
      g2[:, perm], be2[:, perm],
  )


@jax.jit
def encoder_layer(x, params):
  # Permute features to split order and collapse the batch into the row dim.
  x_p = x[..., _PERM].reshape(N, D)
  cos_t, sin_t = _split_rope_tables()
  # Block-diagonal additive mask: tokens only attend within their own batch element.
  row_blk = jnp.arange(N) // S
  mask = jnp.where(row_blk[:, None] == row_blk[None, :], 0.0, NEG_INF).astype(jnp.float32)

  args = (x_p, cos_t, sin_t, mask) + prepare_kernel_params(params)

  # Single grid step: on single-TC chips (v5e/v6e) this removes per-step overhead and
  # doubles MXU row occupancy.  On dual-TC v7x with larger batches, keep the batch axis
  # as a "parallel" grid dimension instead of collapsing it.
  out_p = pl.pallas_call(
      encoder_layer_kernel,
      out_shape=jax.ShapeDtypeStruct((N, D), jnp.float32),
      grid=(1,),
      in_specs=[_full_spec(a) for a in args],
      out_specs=pl.BlockSpec((N, D), lambda i: (0, 0)),
      compiler_params=pltpu.CompilerParams(dimension_semantics=("arbitrary",)),
  )(*args)

  return out_p.reshape(B, S, D)[..., _INV_PERM]


# --------------------------- reference (plain JAX) ---------------------------
def rotate_half(x):
  """rotary_embedding_torch.rotate_half: (x0,x1,x2,x3,...) -> (-x1,x0,-x3,x2,...)."""
  x1 = x[..., 0::2]
  x2 = x[..., 1::2]
  return jnp.stack((-x2, x1), axis=-1).reshape(x.shape)


def rope_tables_interleaved():
  inv = 1.0 / (ROPE_THETA ** (jnp.arange(0, D, 2, dtype=jnp.float32) / D))
  freqs = jnp.arange(S, dtype=jnp.float32)[:, None] * inv[None, :]    # (S, D/2)
  freqs = jnp.repeat(freqs, 2, axis=-1)                               # (S, D) interleaved
  return jnp.cos(freqs), jnp.sin(freqs)


def reference(x, params):
  (wq, bq, wk, bk, wv, bv, wo, bo, g1, be1, w1, b1, w2, b2, g2, be2) = params
  cos, sin = rope_tables_interleaved()
  qk = x * cos + rotate_half(x) * sin
  q = qk @ wq + bq
  k = qk @ wk + bk
  v = x @ wv + bv
  qh = q.reshape(B, S, H, HD).transpose(0, 2, 1, 3)
  kh = k.reshape(B, S, H, HD).transpose(0, 2, 1, 3)
  vh = v.reshape(B, S, H, HD).transpose(0, 2, 1, 3)
  s = jnp.einsum("bhqd,bhkd->bhqk", qh, kh) / math.sqrt(HD)
  p = jax.nn.softmax(s, axis=-1)
  o = jnp.einsum("bhqk,bhkd->bhqd", p, vh).transpose(0, 2, 1, 3).reshape(B, S, D)
  attn = o @ wo + bo

  def ln(y, g, b):
    mu = y.mean(-1, keepdims=True)
    var = ((y - mu) ** 2).mean(-1, keepdims=True)
    return (y - mu) / jnp.sqrt(var + EPS) * g + b

  h1 = ln(x + attn, g1, be1)
  ff = jnp.maximum(h1 @ w1 + b1, 0.0) @ w2 + b2
  return ln(h1 + ff, g2, be2)


# --------------------------------- main --------------------------------------
def init_params(key):
  ks = jax.random.split(key, 10)

  def lin(k, fan_in, fan_out):
    kw, kb = jax.random.split(k)
    bound = 1.0 / math.sqrt(fan_in)
    w = jax.random.uniform(kw, (fan_in, fan_out), jnp.float32, -bound, bound)
    b = jax.random.uniform(kb, (1, fan_out), jnp.float32, -bound, bound)
    return w, b

  wq, bq = lin(ks[0], D, D)
  wk, bk = lin(ks[1], D, D)
  wv, bv = lin(ks[2], D, D)
  wo, bo = lin(ks[3], D, D)
  g1 = 1.0 + 0.1 * jax.random.normal(ks[4], (1, D), jnp.float32)
  be1 = 0.1 * jax.random.normal(ks[5], (1, D), jnp.float32)
  w1, b1 = lin(ks[6], D, DFF)
  w2, b2 = lin(ks[7], DFF, D)
  g2 = 1.0 + 0.1 * jax.random.normal(ks[8], (1, D), jnp.float32)
  be2 = 0.1 * jax.random.normal(ks[9], (1, D), jnp.float32)
  return (wq, bq, wk, bk, wv, bv, wo, bo, g1, be1, w1, b1, w2, b2, g2, be2)


if __name__ == "__main__":
  key = jax.random.PRNGKey(0)
  kx, kp = jax.random.split(key)
  x = jax.random.normal(kx, (B, S, D), jnp.float32)
  params = init_params(kp)

  out = jax.block_until_ready(encoder_layer(x, params))
  ref = jax.block_until_ready(reference(x, params))

  assert out.shape == (B, S, D)
  assert bool(jnp.all(jnp.isfinite(out)))
  # Kernel uses bf16 weights (f32 accumulation) and an approx reciprocal in the
  # softmax; reference is pure f32, so allow a bf16-sized tolerance.
  max_err = float(jnp.max(jnp.abs(out - ref)))
  assert max_err < 5e-2, f"mismatch vs reference: {max_err}"
  print("KERNEL_OK")
</pallas_src>

<mosaic_0001>
module attributes {stable_mosaic.version = 11 : i64} {
  func.func @encoder_layer_kernel(%arg0: i32, %arg1: memref<16x128xf32, #tpu.memory_space<vmem>>, %arg2: memref<16x128xf32, #tpu.memory_space<vmem>>, %arg3: memref<16x128xf32, #tpu.memory_space<vmem>>, %arg4: memref<16x16xf32, #tpu.memory_space<vmem>>, %arg5: memref<128x256xbf16, #tpu.memory_space<vmem>>, %arg6: memref<1x256xf32, #tpu.memory_space<vmem>>, %arg7: memref<128x128xbf16, #tpu.memory_space<vmem>>, %arg8: memref<1x128xf32, #tpu.memory_space<vmem>>, %arg9: memref<8x16x128xbf16, #tpu.memory_space<vmem>>, %arg10: memref<1x128xf32, #tpu.memory_space<vmem>>, %arg11: memref<1x128xf32, #tpu.memory_space<vmem>>, %arg12: memref<1x128xf32, #tpu.memory_space<vmem>>, %arg13: memref<128x256xbf16, #tpu.memory_space<vmem>>, %arg14: memref<1x256xf32, #tpu.memory_space<vmem>>, %arg15: memref<256x128xbf16, #tpu.memory_space<vmem>>, %arg16: memref<1x128xf32, #tpu.memory_space<vmem>>, %arg17: memref<1x128xf32, #tpu.memory_space<vmem>>, %arg18: memref<1x128xf32, #tpu.memory_space<vmem>>, %arg19: memref<16x128xf32, #tpu.memory_space<vmem>>) attributes {dimension_semantics = [#tpu.dimension_semantics<arbitrary>], iteration_bounds = array<i64: 1>, scalar_prefetch = 0 : i64, scratch_operands = 0 : i64, tpu.core_type = #tpu.core_type<tc>, window_params = [{pipeline_mode = #tpu.pipeline_mode<synchronous>, transform_indices = @transform_0, window_bounds = array<i64: 16, 128>}, {pipeline_mode = #tpu.pipeline_mode<synchronous>, transform_indices = @transform_1, window_bounds = array<i64: 16, 128>}, {pipeline_mode = #tpu.pipeline_mode<synchronous>, transform_indices = @transform_2, window_bounds = array<i64: 16, 128>}, {pipeline_mode = #tpu.pipeline_mode<synchronous>, transform_indices = @transform_3, window_bounds = array<i64: 16, 16>}, {pipeline_mode = #tpu.pipeline_mode<synchronous>, transform_indices = @transform_4, window_bounds = array<i64: 128, 256>}, {pipeline_mode = #tpu.pipeline_mode<synchronous>, transform_indices = @transform_5, window_bounds = array<i64: 1, 256>}, {pipeline_mode = #tpu.pipeline_mode<synchronous>, transform_indices = @transform_6, window_bounds = array<i64: 128, 128>}, {pipeline_mode = #tpu.pipeline_mode<synchronous>, transform_indices = @transform_7, window_bounds = array<i64: 1, 128>}, {pipeline_mode = #tpu.pipeline_mode<synchronous>, transform_indices = @transform_8, window_bounds = array<i64: 8, 16, 128>}, {pipeline_mode = #tpu.pipeline_mode<synchronous>, transform_indices = @transform_9, window_bounds = array<i64: 1, 128>}, {pipeline_mode = #tpu.pipeline_mode<synchronous>, transform_indices = @transform_10, window_bounds = array<i64: 1, 128>}, {pipeline_mode = #tpu.pipeline_mode<synchronous>, transform_indices = @transform_11, window_bounds = array<i64: 1, 128>}, {pipeline_mode = #tpu.pipeline_mode<synchronous>, transform_indices = @transform_12, window_bounds = array<i64: 128, 256>}, {pipeline_mode = #tpu.pipeline_mode<synchronous>, transform_indices = @transform_13, window_bounds = array<i64: 1, 256>}, {pipeline_mode = #tpu.pipeline_mode<synchronous>, transform_indices = @transform_14, window_bounds = array<i64: 256, 128>}, {pipeline_mode = #tpu.pipeline_mode<synchronous>, transform_indices = @transform_15, window_bounds = array<i64: 1, 128>}, {pipeline_mode = #tpu.pipeline_mode<synchronous>, transform_indices = @transform_16, window_bounds = array<i64: 1, 128>}, {pipeline_mode = #tpu.pipeline_mode<synchronous>, transform_indices = @transform_17, window_bounds = array<i64: 1, 128>}, {pipeline_mode = #tpu.pipeline_mode<synchronous>, transform_indices = @transform_18, window_bounds = array<i64: 16, 128>}]} {
    %c0 = arith.constant 0 : index
    %c0_0 = arith.constant 0 : index
    %0 = vector.load %arg1[%c0, %c0_0] : memref<16x128xf32, #tpu.memory_space<vmem>>, vector<16x128xf32>
    %c64_i32 = arith.constant 64 : i32
    %1 = tpu.dynamic_rotate %0 by %c64_i32 dim 1 : vector<16x128xf32>, i32 -> vector<16x128xf32>
    %c0_1 = arith.constant 0 : index
    %c0_2 = arith.constant 0 : index
    %2 = vector.load %arg2[%c0_1, %c0_2] : memref<16x128xf32, #tpu.memory_space<vmem>>, vector<16x128xf32>
    %3 = arith.mulf %0, %2 : vector<16x128xf32>
    %c0_3 = arith.constant 0 : index
    %c0_4 = arith.constant 0 : index
    %4 = vector.load %arg3[%c0_3, %c0_4] : memref<16x128xf32, #tpu.memory_space<vmem>>, vector<16x128xf32>
    %5 = arith.mulf %1, %4 : vector<16x128xf32>
    %6 = arith.addf %3, %5 : vector<16x128xf32>
    %7 = arith.truncf %6 : vector<16x128xf32> to vector<16x128xbf16>
    %c0_5 = arith.constant 0 : index
    %c0_6 = arith.constant 0 : index
    %8 = vector.load %arg5[%c0_5, %c0_6] : memref<128x256xbf16, #tpu.memory_space<vmem>>, vector<128x256xbf16>
    %cst = arith.constant dense<0.000000e+00> : vector<16x256xf32>
    %9 = tpu.matmul %7, %8, %cst {dimension_numbers = #tpu.dot_dimension_numbers<[1], [0], [0], [1], [0, 0, 1, 1], [], []>} : vector<16x128xbf16>, vector<128x256xbf16>, vector<16x256xf32> -> vector<16x256xf32>
    %c0_7 = arith.constant 0 : index
    %c0_8 = arith.constant 0 : index
    %10 = vector.load %arg6[%c0_7, %c0_8] : memref<1x256xf32, #tpu.memory_space<vmem>>, vector<1x256xf32>
    %11 = vector.broadcast %10 : vector<1x256xf32> to vector<16x256xf32>
    %12 = arith.addf %9, %11 : vector<16x256xf32>
    %13 = arith.truncf %0 : vector<16x128xf32> to vector<16x128xbf16>
    %c0_9 = arith.constant 0 : index
    %c0_10 = arith.constant 0 : index
    %14 = vector.load %arg7[%c0_9, %c0_10] : memref<128x128xbf16, #tpu.memory_space<vmem>>, vector<128x128xbf16>
    %cst_11 = arith.constant dense<0.000000e+00> : vector<16x128xf32>
    %15 = tpu.matmul %13, %14, %cst_11 {dimension_numbers = #tpu.dot_dimension_numbers<[1], [0], [0], [1], [0, 0, 1, 1], [], []>} : vector<16x128xbf16>, vector<128x128xbf16>, vector<16x128xf32> -> vector<16x128xf32>
    %c0_12 = arith.constant 0 : index
    %c0_13 = arith.constant 0 : index
    %16 = vector.load %arg8[%c0_12, %c0_13] : memref<1x128xf32, #tpu.memory_space<vmem>>, vector<1x128xf32>
    %17 = vector.broadcast %16 : vector<1x128xf32> to vector<16x128xf32>
    %18 = arith.addf %15, %17 : vector<16x128xf32>
    %19 = tpu.transpose %12, [1, 0] : vector<16x256xf32> -> vector<256x16xf32>
    %20 = vector.extract_strided_slice %19 {offsets = [0, 0], sizes = [128, 16], strides = [1, 1]} : vector<256x16xf32> to vector<128x16xf32>
    %21 = vector.shape_cast %20 : vector<128x16xf32> to vector<8x16x16xf32>
    %22 = vector.extract_strided_slice %19 {offsets = [128, 0], sizes = [128, 16], strides = [1, 1]} : vector<256x16xf32> to vector<128x16xf32>
    %23 = vector.shape_cast %22 : vector<128x16xf32> to vector<8x16x16xf32>
    %24 = tpu.transpose %18, [1, 0] : vector<16x128xf32> -> vector<128x16xf32>
    %25 = vector.shape_cast %24 : vector<128x16xf32> to vector<8x16x16xf32>
    %26 = tpu.transpose %21, [0, 2, 1] : vector<8x16x16xf32> -> vector<8x16x16xf32>
    "tpu.trace_start"() <{level = 10 : i32, message = "hqd,hdk->hqk"}> : () -> ()
    %cst_14 = arith.constant dense<0.000000e+00> : vector<8x16x16xf32>
    %27 = tpu.matmul %26, %23, %cst_14 {dimension_numbers = #tpu.dot_dimension_numbers<[2], [1], [1], [2], [0, 0, 0, 1, 1, 2], [0], [0]>} : vector<8x16x16xf32>, vector<8x16x16xf32>, vector<8x16x16xf32> -> vector<8x16x16xf32>
    "tpu.trace_stop"() : () -> ()
    %c0_15 = arith.constant 0 : index
    %c0_16 = arith.constant 0 : index
    %28 = vector.load %arg4[%c0_15, %c0_16] : memref<16x16xf32, #tpu.memory_space<vmem>>, vector<16x16xf32>
    %29 = vector.shape_cast %28 : vector<16x16xf32> to vector<1x16x16xf32>
    %30 = vector.broadcast %29 : vector<1x16x16xf32> to vector<8x16x16xf32>
    %31 = arith.addf %27, %30 : vector<8x16x16xf32>
    %cst_17 = arith.constant dense<0xFF800000> : vector<8x16xf32>
    %32 = vector.multi_reduction <maximumf>, %31, %cst_17 [2] : vector<8x16x16xf32> to vector<8x16xf32>
    %33 = vector.shape_cast %32 : vector<8x16xf32> to vector<8x16x1xf32>
    %34 = vector.broadcast %33 : vector<8x16x1xf32> to vector<8x16x16xf32>
    %35 = arith.subf %31, %34 : vector<8x16x16xf32>
    %36 = math.exp %35 : vector<8x16x16xf32>
    %cst_18 = arith.constant dense<0.000000e+00> : vector<8x16xf32>
    %37 = vector.multi_reduction <add>, %36, %cst_18 [2] : vector<8x16x16xf32> to vector<8x16xf32>
    %38 = vector.shape_cast %37 : vector<8x16xf32> to vector<8x16x1xf32>
    %39 = tpu.reciprocal %38 {approx = true} : vector<8x16x1xf32> -> vector<8x16x1xf32>
    %40 = vector.broadcast %39 : vector<8x16x1xf32> to vector<8x16x16xf32>
    %41 = arith.mulf %36, %40 : vector<8x16x16xf32>
    "tpu.trace_start"() <{level = 10 : i32, message = "hqk,hdk->hqd"}> : () -> ()
    %cst_19 = arith.constant dense<0.000000e+00> : vector<8x16x16xf32>
    %42 = tpu.matmul %41, %25, %cst_19 {dimension_numbers = #tpu.dot_dimension_numbers<[2], [2], [1], [1], [0, 0, 0, 1, 1, 1], [0], [0]>} : vector<8x16x16xf32>, vector<8x16x16xf32>, vector<8x16x16xf32> -> vector<8x16x16xf32>
    "tpu.trace_stop"() : () -> ()
    %43 = arith.truncf %42 : vector<8x16x16xf32> to vector<8x16x16xbf16>
    %c0_20 = arith.constant 0 : index
    %c0_21 = arith.constant 0 : index
    %c0_22 = arith.constant 0 : index
    %44 = vector.load %arg9[%c0_20, %c0_21, %c0_22] : memref<8x16x128xbf16, #tpu.memory_space<vmem>>, vector<8x16x128xbf16>
    "tpu.trace_start"() <{level = 10 : i32, message = "hqd,hdm->hqm"}> : () -> ()
    %cst_23 = arith.constant dense<0.000000e+00> : vector<8x16x128xf32>
    %45 = tpu.matmul %43, %44, %cst_23 {dimension_numbers = #tpu.dot_dimension_numbers<[2], [1], [1], [2], [0, 0, 0, 1, 1, 2], [0], [0]>} : vector<8x16x16xbf16>, vector<8x16x128xbf16>, vector<8x16x128xf32> -> vector<8x16x128xf32>
    "tpu.trace_stop"() : () -> ()
    %cst_24 = arith.constant dense<0.000000e+00> : vector<16x128xf32>
    %46 = vector.multi_reduction <add>, %45, %cst_24 [0] : vector<8x16x128xf32> to vector<16x128xf32>
    %c0_25 = arith.constant 0 : index
    %c0_26 = arith.constant 0 : index
    %47 = vector.load %arg10[%c0_25, %c0_26] : memref<1x128xf32, #tpu.memory_space<vmem>>, vector<1x128xf32>
    %48 = vector.broadcast %47 : vector<1x128xf32> to vector<16x128xf32>
    %49 = arith.addf %46, %48 : vector<16x128xf32>
    %50 = arith.addf %0, %49 : vector<16x128xf32>
    %c0_27 = arith.constant 0 : index
    %c0_28 = arith.constant 0 : index
    %51 = vector.load %arg11[%c0_27, %c0_28] : memref<1x128xf32, #tpu.memory_space<vmem>>, vector<1x128xf32>
    %c0_29 = arith.constant 0 : index
    %c0_30 = arith.constant 0 : index
    %52 = vector.load %arg12[%c0_29, %c0_30] : memref<1x128xf32, #tpu.memory_space<vmem>>, vector<1x128xf32>
    %cst_31 = arith.constant dense<0.000000e+00> : vector<16xf32>
    %53 = vector.multi_reduction <add>, %50, %cst_31 [1] : vector<16x128xf32> to vector<16xf32>
    %54 = vector.shape_cast %53 : vector<16xf32> to vector<16x1xf32>
    %cst_32 = arith.constant 1.280000e+02 : f32
    %55 = vector.broadcast %cst_32 : f32 to vector<16x1xf32>
    %56 = arith.divf %54, %55 : vector<16x1xf32>
    %57 = vector.broadcast %56 : vector<16x1xf32> to vector<16x128xf32>
    %58 = arith.subf %50, %57 : vector<16x128xf32>
    %59 = arith.mulf %58, %58 : vector<16x128xf32>
    %cst_33 = arith.constant dense<0.000000e+00> : vector<16xf32>
    %60 = vector.multi_reduction <add>, %59, %cst_33 [1] : vector<16x128xf32> to vector<16xf32>
    %61 = vector.shape_cast %60 : vector<16xf32> to vector<16x1xf32>
    %cst_34 = arith.constant 1.280000e+02 : f32
    %62 = vector.broadcast %cst_34 : f32 to vector<16x1xf32>
    %63 = arith.divf %61, %62 : vector<16x1xf32>
    %64 = vector.broadcast %56 : vector<16x1xf32> to vector<16x128xf32>
    %65 = arith.subf %50, %64 : vector<16x128xf32>
    %cst_35 = arith.constant 9.99999974E-6 : f32
    %66 = vector.broadcast %cst_35 : f32 to vector<16x1xf32>
    %67 = arith.addf %63, %66 : vector<16x1xf32>
    %68 = math.rsqrt %67 : vector<16x1xf32>
    %69 = vector.broadcast %68 : vector<16x1xf32> to vector<16x128xf32>
    %70 = arith.mulf %65, %69 : vector<16x128xf32>
    %71 = vector.broadcast %51 : vector<1x128xf32> to vector<16x128xf32>
    %72 = arith.mulf %70, %71 : vector<16x128xf32>
    %73 = vector.broadcast %52 : vector<1x128xf32> to vector<16x128xf32>
    %74 = arith.addf %72, %73 : vector<16x128xf32>
    %75 = arith.truncf %74 : vector<16x128xf32> to vector<16x128xbf16>
    %c0_36 = arith.constant 0 : index
    %c0_37 = arith.constant 0 : index
    %76 = vector.load %arg13[%c0_36, %c0_37] : memref<128x256xbf16, #tpu.memory_space<vmem>>, vector<128x256xbf16>
    %cst_38 = arith.constant dense<0.000000e+00> : vector<16x256xf32>
    %77 = tpu.matmul %75, %76, %cst_38 {dimension_numbers = #tpu.dot_dimension_numbers<[1], [0], [0], [1], [0, 0, 1, 1], [], []>} : vector<16x128xbf16>, vector<128x256xbf16>, vector<16x256xf32> -> vector<16x256xf32>
    %c0_39 = arith.constant 0 : index
    %c0_40 = arith.constant 0 : index
    %78 = vector.load %arg14[%c0_39, %c0_40] : memref<1x256xf32, #tpu.memory_space<vmem>>, vector<1x256xf32>
    %79 = vector.broadcast %78 : vector<1x256xf32> to vector<16x256xf32>
    %80 = arith.addf %77, %79 : vector<16x256xf32>
    %cst_41 = arith.constant 0.000000e+00 : f32
    %81 = vector.broadcast %cst_41 : f32 to vector<16x256xf32>
    %82 = arith.maximumf %80, %81 : vector<16x256xf32>
    %83 = arith.truncf %82 : vector<16x256xf32> to vector<16x256xbf16>
    %c0_42 = arith.constant 0 : index
    %c0_43 = arith.constant 0 : index
    %84 = vector.load %arg15[%c0_42, %c0_43] : memref<256x128xbf16, #tpu.memory_space<vmem>>, vector<256x128xbf16>
    %cst_44 = arith.constant dense<0.000000e+00> : vector<16x128xf32>
    %85 = tpu.matmul %83, %84, %cst_44 {dimension_numbers = #tpu.dot_dimension_numbers<[1], [0], [0], [1], [0, 0, 1, 1], [], []>} : vector<16x256xbf16>, vector<256x128xbf16>, vector<16x128xf32> -> vector<16x128xf32>
    %c0_45 = arith.constant 0 : index
    %c0_46 = arith.constant 0 : index
    %86 = vector.load %arg16[%c0_45, %c0_46] : memref<1x128xf32, #tpu.memory_space<vmem>>, vector<1x128xf32>
    %87 = vector.broadcast %86 : vector<1x128xf32> to vector<16x128xf32>
    %88 = arith.addf %85, %87 : vector<16x128xf32>
    %89 = arith.addf %74, %88 : vector<16x128xf32>
    %c0_47 = arith.constant 0 : index
    %c0_48 = arith.constant 0 : index
    %90 = vector.load %arg17[%c0_47, %c0_48] : memref<1x128xf32, #tpu.memory_space<vmem>>, vector<1x128xf32>
    %c0_49 = arith.constant 0 : index
    %c0_50 = arith.constant 0 : index
    %91 = vector.load %arg18[%c0_49, %c0_50] : memref<1x128xf32, #tpu.memory_space<vmem>>, vector<1x128xf32>
    %cst_51 = arith.constant dense<0.000000e+00> : vector<16xf32>
    %92 = vector.multi_reduction <add>, %89, %cst_51 [1] : vector<16x128xf32> to vector<16xf32>
    %93 = vector.shape_cast %92 : vector<16xf32> to vector<16x1xf32>
    %cst_52 = arith.constant 1.280000e+02 : f32
    %94 = vector.broadcast %cst_52 : f32 to vector<16x1xf32>
    %95 = arith.divf %93, %94 : vector<16x1xf32>
    %96 = vector.broadcast %95 : vector<16x1xf32> to vector<16x128xf32>
    %97 = arith.subf %89, %96 : vector<16x128xf32>
    %98 = arith.mulf %97, %97 : vector<16x128xf32>
    %cst_53 = arith.constant dense<0.000000e+00> : vector<16xf32>
    %99 = vector.multi_reduction <add>, %98, %cst_53 [1] : vector<16x128xf32> to vector<16xf32>
    %100 = vector.shape_cast %99 : vector<16xf32> to vector<16x1xf32>
    %cst_54 = arith.constant 1.280000e+02 : f32
    %101 = vector.broadcast %cst_54 : f32 to vector<16x1xf32>
    %102 = arith.divf %100, %101 : vector<16x1xf32>
    %103 = vector.broadcast %95 : vector<16x1xf32> to vector<16x128xf32>
    %104 = arith.subf %89, %103 : vector<16x128xf32>
    %cst_55 = arith.constant 9.99999974E-6 : f32
    %105 = vector.broadcast %cst_55 : f32 to vector<16x1xf32>
    %106 = arith.addf %102, %105 : vector<16x1xf32>
    %107 = math.rsqrt %106 : vector<16x1xf32>
    %108 = vector.broadcast %107 : vector<16x1xf32> to vector<16x128xf32>
    %109 = arith.mulf %104, %108 : vector<16x128xf32>
    %110 = vector.broadcast %90 : vector<1x128xf32> to vector<16x128xf32>
    %111 = arith.mulf %109, %110 : vector<16x128xf32>
    %112 = vector.broadcast %91 : vector<1x128xf32> to vector<16x128xf32>
    %113 = arith.addf %111, %112 : vector<16x128xf32>
    %c0_56 = arith.constant 0 : index
    %c0_57 = arith.constant 0 : index
    %114 = vector.load %arg19[%c0_56, %c0_57] : memref<16x128xf32, #tpu.memory_space<vmem>>, vector<16x128xf32>
    tpu.vector_store %arg19[%c0_56, %c0_57], %113 {strides = array<i32>} : memref<16x128xf32, #tpu.memory_space<vmem>>, vector<16x128xf32>,
    return
  }
  func.func @transform_0(%arg0: i32) -> (i32, i32) {
    %c0_i32 = arith.constant 0 : i32
    %c0_i32_0 = arith.constant 0 : i32
    %c0_i32_1 = arith.constant 0 : i32
    return %c0_i32, %c0_i32_0 : i32, i32
  }
  func.func @transform_1(%arg0: i32) -> (i32, i32) {
    %c0_i32 = arith.constant 0 : i32
    %c0_i32_0 = arith.constant 0 : i32
    %c0_i32_1 = arith.constant 0 : i32
    return %c0_i32, %c0_i32_0 : i32, i32
  }
  func.func @transform_2(%arg0: i32) -> (i32, i32) {
    %c0_i32 = arith.constant 0 : i32
    %c0_i32_0 = arith.constant 0 : i32
    %c0_i32_1 = arith.constant 0 : i32
    return %c0_i32, %c0_i32_0 : i32, i32
  }
  func.func @transform_3(%arg0: i32) -> (i32, i32) {
    %c0_i32 = arith.constant 0 : i32
    %c0_i32_0 = arith.constant 0 : i32
    %c0_i32_1 = arith.constant 0 : i32
    return %c0_i32, %c0_i32_0 : i32, i32
  }
  func.func @transform_4(%arg0: i32) -> (i32, i32) {
    %c0_i32 = arith.constant 0 : i32
    %c0_i32_0 = arith.constant 0 : i32
    %c0_i32_1 = arith.constant 0 : i32
    return %c0_i32, %c0_i32_0 : i32, i32
  }
  func.func @transform_5(%arg0: i32) -> (i32, i32) {
    %c0_i32 = arith.constant 0 : i32
    %c0_i32_0 = arith.constant 0 : i32
    %c0_i32_1 = arith.constant 0 : i32
    return %c0_i32, %c0_i32_0 : i32, i32
  }
  func.func @transform_6(%arg0: i32) -> (i32, i32) {
    %c0_i32 = arith.constant 0 : i32
    %c0_i32_0 = arith.constant 0 : i32
    %c0_i32_1 = arith.constant 0 : i32
    return %c0_i32, %c0_i32_0 : i32, i32
  }
  func.func @transform_7(%arg0: i32) -> (i32, i32) {
    %c0_i32 = arith.constant 0 : i32
    %c0_i32_0 = arith.constant 0 : i32
    %c0_i32_1 = arith.constant 0 : i32
    return %c0_i32, %c0_i32_0 : i32, i32
  }
  func.func @transform_8(%arg0: i32) -> (i32, i32, i32) {
    %c0_i32 = arith.constant 0 : i32
    %c0_i32_0 = arith.constant 0 : i32
    %c0_i32_1 = arith.constant 0 : i32
    %c0_i32_2 = arith.constant 0 : i32
    return %c0_i32, %c0_i32_0, %c0_i32_1 : i32, i32, i32
  }
  func.func @transform_9(%arg0: i32) -> (i32, i32) {
    %c0_i32 = arith.constant 0 : i32
    %c0_i32_0 = arith.constant 0 : i32
    %c0_i32_1 = arith.constant 0 : i32
    return %c0_i32, %c0_i32_0 : i32, i32
  }
  func.func @transform_10(%arg0: i32) -> (i32, i32) {
    %c0_i32 = arith.constant 0 : i32
    %c0_i32_0 = arith.constant 0 : i32
    %c0_i32_1 = arith.constant 0 : i32
    return %c0_i32, %c0_i32_0 : i32, i32
  }
  func.func @transform_11(%arg0: i32) -> (i32, i32) {
    %c0_i32 = arith.constant 0 : i32
    %c0_i32_0 = arith.constant 0 : i32
    %c0_i32_1 = arith.constant 0 : i32
    return %c0_i32, %c0_i32_0 : i32, i32
  }
  func.func @transform_12(%arg0: i32) -> (i32, i32) {
    %c0_i32 = arith.constant 0 : i32
    %c0_i32_0 = arith.constant 0 : i32
    %c0_i32_1 = arith.constant 0 : i32
    return %c0_i32, %c0_i32_0 : i32, i32
  }
  func.func @transform_13(%arg0: i32) -> (i32, i32) {
    %c0_i32 = arith.constant 0 : i32
    %c0_i32_0 = arith.constant 0 : i32
    %c0_i32_1 = arith.constant 0 : i32
    return %c0_i32, %c0_i32_0 : i32, i32
  }
  func.func @transform_14(%arg0: i32) -> (i32, i32) {
    %c0_i32 = arith.constant 0 : i32
    %c0_i32_0 = arith.constant 0 : i32
    %c0_i32_1 = arith.constant 0 : i32
    return %c0_i32, %c0_i32_0 : i32, i32
  }
  func.func @transform_15(%arg0: i32) -> (i32, i32) {
    %c0_i32 = arith.constant 0 : i32
    %c0_i32_0 = arith.constant 0 : i32
    %c0_i32_1 = arith.constant 0 : i32
    return %c0_i32, %c0_i32_0 : i32, i32
  }
  func.func @transform_16(%arg0: i32) -> (i32, i32) {
    %c0_i32 = arith.constant 0 : i32
    %c0_i32_0 = arith.constant 0 : i32
    %c0_i32_1 = arith.constant 0 : i32
    return %c0_i32, %c0_i32_0 : i32, i32
  }
  func.func @transform_17(%arg0: i32) -> (i32, i32) {
    %c0_i32 = arith.constant 0 : i32
    %c0_i32_0 = arith.constant 0 : i32
    %c0_i32_1 = arith.constant 0 : i32
    return %c0_i32, %c0_i32_0 : i32, i32
  }
  func.func @transform_18(%arg0: i32) -> (i32, i32) {
    %c0_i32 = arith.constant 0 : i32
    %c0_i32_0 = arith.constant 0 : i32
    %c0_i32_1 = arith.constant 0 : i32
    return %c0_i32, %c0_i32_0 : i32, i32
  }
}

</mosaic_0001>

<llo_original>
// kernel: encoder_layer.1
$region0: #{encoder_layer.1}
  #allocation0 [shape = 'u32[]', space=smem, size = 0x4, offset = 0x4, fixed_abs, tag = 'smem constant byte address 0x4 - core index']
  #allocation1 [shape = 'u32[72,128]{1,0:T(1,128)}', space=vmem, size = 0x9000, scoped, tag = 'internal scratch']
  %s0 = inlined_call_operand.vmem [shape: f32[16,128], index: 0, kind: input, shape index: {}]
  %s1 = inlined_call_operand.vmem [shape: f32[16,128], index: 1, kind: input, shape index: {}]
  %s2 = inlined_call_operand.vmem [shape: f32[16,128], index: 2, kind: input, shape index: {}]
  %s3 = inlined_call_operand.vmem [shape: f32[16,16], index: 3, kind: input, shape index: {}]
  %s4 = inlined_call_operand.vmem [shape: bf16[128,256], index: 4, kind: input, shape index: {}]
  %s5 = inlined_call_operand.vmem [shape: f32[1,256], index: 5, kind: input, shape index: {}]
  %s6 = inlined_call_operand.vmem [shape: bf16[128,128], index: 6, kind: input, shape index: {}]
  %s7 = inlined_call_operand.vmem [shape: f32[1,128], index: 7, kind: input, shape index: {}]
  %s8 = inlined_call_operand.vmem [shape: bf16[8,16,128], index: 8, kind: input, shape index: {}]
  %s9 = inlined_call_operand.vmem [shape: f32[1,128], index: 9, kind: input, shape index: {}]
  %s10 = inlined_call_operand.vmem [shape: f32[1,128], index: 10, kind: input, shape index: {}]
  %s11 = inlined_call_operand.vmem [shape: f32[1,128], index: 11, kind: input, shape index: {}]
  %s12 = inlined_call_operand.vmem [shape: bf16[128,256], index: 12, kind: input, shape index: {}]
  %s13 = inlined_call_operand.vmem [shape: f32[1,256], index: 13, kind: input, shape index: {}]
  %s14 = inlined_call_operand.vmem [shape: bf16[256,128], index: 14, kind: input, shape index: {}]
  %s15 = inlined_call_operand.vmem [shape: f32[1,128], index: 15, kind: input, shape index: {}]
  %s16 = inlined_call_operand.vmem [shape: f32[1,128], index: 16, kind: input, shape index: {}]
  %s17 = inlined_call_operand.vmem [shape: f32[1,128], index: 17, kind: input, shape index: {}]
  %s18 = inlined_call_operand.vmem [shape: f32[16,128], index: 18, kind: output, shape index: {}]
  %s19 = sld [smem:[#allocation0]]
  $region82: #{encoder_layer.1} parent=0
    _
  %s21 = ssub.s32 1, %s19
  %s22 = scalar_select 0, %s21, %s19
  // Predicated region
  $region2: #{encoder_layer.1} parent=0 // pred_check
    _
  $region3: #{encoder_layer.1} parent=0 // pred_check_branch
    %24 = sbr.rel (0) target = $region5
  $region4: #{encoder_layer.1} parent=0 // pred_region
    _
  $region5: #{encoder_layer.1} parent=0 // pred_fallthru
    _
  // Predicated region
  $region6: #{encoder_layer.1} parent=0 // pred_check
    _
  $region7: #{encoder_layer.1} parent=0 // pred_check_branch
    %26 = sbr.rel (0) target = $region9
  $region8: #{encoder_layer.1} parent=0 // pred_region
    _
  $region9: #{encoder_layer.1} parent=0 // pred_fallthru
    _
  // Predicated region
  $region10: #{encoder_layer.1} parent=0 // pred_check
    _
  $region11: #{encoder_layer.1} parent=0 // pred_check_branch
    %28 = sbr.rel (0) target = $region13
  $region12: #{encoder_layer.1} parent=0 // pred_region
    _
  $region13: #{encoder_layer.1} parent=0 // pred_fallthru
    _
  // Predicated region
  $region14: #{encoder_layer.1} parent=0 // pred_check
    _
  $region15: #{encoder_layer.1} parent=0 // pred_check_branch
    %30 = sbr.rel (0) target = $region17
  $region16: #{encoder_layer.1} parent=0 // pred_region
    _
  $region17: #{encoder_layer.1} parent=0 // pred_fallthru
    _
  // Predicated region
  $region18: #{encoder_layer.1} parent=0 // pred_check
    _
  $region19: #{encoder_layer.1} parent=0 // pred_check_branch
    %32 = sbr.rel (0) target = $region21
  $region20: #{encoder_layer.1} parent=0 // pred_region
    _
  $region21: #{encoder_layer.1} parent=0 // pred_fallthru
    _
  // Predicated region
  $region22: #{encoder_layer.1} parent=0 // pred_check
    _
  $region23: #{encoder_layer.1} parent=0 // pred_check_branch
    %34 = sbr.rel (0) target = $region25
  $region24: #{encoder_layer.1} parent=0 // pred_region
    _
  $region25: #{encoder_layer.1} parent=0 // pred_fallthru
    _
  // Predicated region
  $region26: #{encoder_layer.1} parent=0 // pred_check
    _
  $region27: #{encoder_layer.1} parent=0 // pred_check_branch
    %36 = sbr.rel (0) target = $region29
  $region28: #{encoder_layer.1} parent=0 // pred_region
    _
  $region29: #{encoder_layer.1} parent=0 // pred_fallthru
    _
  // Predicated region
  $region30: #{encoder_layer.1} parent=0 // pred_check
    _
  $region31: #{encoder_layer.1} parent=0 // pred_check_branch
    %38 = sbr.rel (0) target = $region33
  $region32: #{encoder_layer.1} parent=0 // pred_region
    _
  $region33: #{encoder_layer.1} parent=0 // pred_fallthru
    _
  // Predicated region
  $region34: #{encoder_layer.1} parent=0 // pred_check
    _
  $region35: #{encoder_layer.1} parent=0 // pred_check_branch
    %40 = sbr.rel (0) target = $region37
  $region36: #{encoder_layer.1} parent=0 // pred_region
    _
  $region37: #{encoder_layer.1} parent=0 // pred_fallthru
    _
  // Predicated region
  $region38: #{encoder_layer.1} parent=0 // pred_check
    _
  $region39: #{encoder_layer.1} parent=0 // pred_check_branch
    %42 = sbr.rel (0) target = $region41
  $region40: #{encoder_layer.1} parent=0 // pred_region
    _
  $region41: #{encoder_layer.1} parent=0 // pred_fallthru
    _
  // Predicated region
  $region42: #{encoder_layer.1} parent=0 // pred_check
    _
  $region43: #{encoder_layer.1} parent=0 // pred_check_branch
    %44 = sbr.rel (0) target = $region45
  $region44: #{encoder_layer.1} parent=0 // pred_region
    _
  $region45: #{encoder_layer.1} parent=0 // pred_fallthru
    _
  // Predicated region
  $region46: #{encoder_layer.1} parent=0 // pred_check
    _
  $region47: #{encoder_layer.1} parent=0 // pred_check_branch
    %46 = sbr.rel (0) target = $region49
  $region48: #{encoder_layer.1} parent=0 // pred_region
    _
  $region49: #{encoder_layer.1} parent=0 // pred_fallthru
    _
  // Predicated region
  $region50: #{encoder_layer.1} parent=0 // pred_check
    _
  $region51: #{encoder_layer.1} parent=0 // pred_check_branch
    %48 = sbr.rel (0) target = $region53
  $region52: #{encoder_layer.1} parent=0 // pred_region
    _
  $region53: #{encoder_layer.1} parent=0 // pred_fallthru
    _
  // Predicated region
  $region54: #{encoder_layer.1} parent=0 // pred_check
    _
  $region55: #{encoder_layer.1} parent=0 // pred_check_branch
    %50 = sbr.rel (0) target = $region57
  $region56: #{encoder_layer.1} parent=0 // pred_region
    _
  $region57: #{encoder_layer.1} parent=0 // pred_fallthru
    _
  // Predicated region
  $region58: #{encoder_layer.1} parent=0 // pred_check
    _
  $region59: #{encoder_layer.1} parent=0 // pred_check_branch
    %52 = sbr.rel (0) target = $region61
  $region60: #{encoder_layer.1} parent=0 // pred_region
    _
  $region61: #{encoder_layer.1} parent=0 // pred_fallthru
    _
  // Predicated region
  $region62: #{encoder_layer.1} parent=0 // pred_check
    _
  $region63: #{encoder_layer.1} parent=0 // pred_check_branch
    %54 = sbr.rel (0) target = $region65
  $region64: #{encoder_layer.1} parent=0 // pred_region
    _
  $region65: #{encoder_layer.1} parent=0 // pred_fallthru
    _
  // Predicated region
  $region66: #{encoder_layer.1} parent=0 // pred_check
    _
  $region67: #{encoder_layer.1} parent=0 // pred_check_branch
    %56 = sbr.rel (0) target = $region69
  $region68: #{encoder_layer.1} parent=0 // pred_region
    _
  $region69: #{encoder_layer.1} parent=0 // pred_fallthru
    _
  // Predicated region
  $region70: #{encoder_layer.1} parent=0 // pred_check
    _
  $region71: #{encoder_layer.1} parent=0 // pred_check_branch
    %58 = sbr.rel (0) target = $region73
  $region72: #{encoder_layer.1} parent=0 // pred_region
    _
  $region73: #{encoder_layer.1} parent=0 // pred_fallthru
    _
  %v60 = vld [vmem:[%s0] sm:$0xff]
  %v61 = vld [vmem:[%s0 + $0x8] sm:$0xff]
  %62 = vrot.lane.b32.xlu0 %v60, 64
  %v63 = vpop.permute.xlu0 %62
  %64 = vrot.lane.b32.xlu0 %v61, 64
  %v65 = vpop.permute.xlu0 %64
  %v66 = vld [vmem:[%s1] sm:$0xff]
  %v67 = vld [vmem:[%s1 + $0x8] sm:$0xff]
  %v68 = vmul.f32 %v60, %v66
  %v69 = vmul.f32 %v61, %v67
  %v70 = vld [vmem:[%s2] sm:$0xff]
  %v71 = vld [vmem:[%s2 + $0x8] sm:$0xff]
  %v72 = vmul.f32 %v63, %v70
  %v73 = vmul.f32 %v65, %v71
  %v74 = vadd.f32 %v68, %v72
  %v75 = vadd.f32 %v69, %v73
  %v76 = vpack.c.bf16 %v75, %v74
  %v77 = vld [vmem:[%s4] sm:$0xff]
  %v78 = vld [vmem:[%s4 + $0x8] sm:$0xff]
  %v79 = vld [vmem:[%s4 + $0x10] sm:$0xff]
  %v80 = vld [vmem:[%s4 + $0x18] sm:$0xff]
  %v81 = vld [vmem:[%s4 + $0x20] sm:$0xff]
  %v82 = vld [vmem:[%s4 + $0x28] sm:$0xff]
  %v83 = vld [vmem:[%s4 + $0x30] sm:$0xff]
  %v84 = vld [vmem:[%s4 + $0x38] sm:$0xff]
  %v85 = vld [vmem:[%s4 + $0x40] sm:$0xff]
  %v86 = vld [vmem:[%s4 + $0x48] sm:$0xff]
  %v87 = vld [vmem:[%s4 + $0x50] sm:$0xff]
  %v88 = vld [vmem:[%s4 + $0x58] sm:$0xff]
  %v89 = vld [vmem:[%s4 + $0x60] sm:$0xff]
  %v90 = vld [vmem:[%s4 + $0x68] sm:$0xff]
  %v91 = vld [vmem:[%s4 + $0x70] sm:$0xff]
  %v92 = vld [vmem:[%s4 + $0x78] sm:$0xff]
  %v93 = vld [vmem:[%s5] sm:$0x3]
  %v95 = vperm.slane %v93, 0
  %v96 = vperm.slane %v93, 1
  %v115 = vunpack.c.l.b16 %v77
  %v116 = vunpack.c.h.b16 %v77
  %v117 = vunpack.c.l.b16 %v78
  %v118 = vunpack.c.h.b16 %v78
  %v119 = vunpack.c.l.b16 %v79
  %v120 = vunpack.c.h.b16 %v79
  %v121 = vunpack.c.l.b16 %v80
  %v122 = vunpack.c.h.b16 %v80
  %v123 = vunpack.c.l.b16 %v81
  %v124 = vunpack.c.h.b16 %v81
  %v125 = vunpack.c.l.b16 %v82
  %v126 = vunpack.c.h.b16 %v82
  %v127 = vunpack.c.l.b16 %v83
  %v128 = vunpack.c.h.b16 %v83
  %v129 = vunpack.c.l.b16 %v84
  %v130 = vunpack.c.h.b16 %v84
  %v131 = vunpack.c.l.b16 %v85
  %v132 = vunpack.c.h.b16 %v85
  %v133 = vunpack.c.l.b16 %v86
  %v134 = vunpack.c.h.b16 %v86
  %v135 = vunpack.c.l.b16 %v87
  %v136 = vunpack.c.h.b16 %v87
  %v137 = vunpack.c.l.b16 %v88
  %v138 = vunpack.c.h.b16 %v88
  %v139 = vunpack.c.l.b16 %v89
  %v140 = vunpack.c.h.b16 %v89
  %v141 = vunpack.c.l.b16 %v90
  %v142 = vunpack.c.h.b16 %v90
  %v143 = vunpack.c.l.b16 %v91
  %v144 = vunpack.c.h.b16 %v91
  %v145 = vunpack.c.l.b16 %v92
  %v146 = vunpack.c.h.b16 %v92
  %v147 = vpack.c.b16 %v117, %v115
  %v148 = vpack.c.b16 %v118, %v116
  %v149 = vpack.c.b16 %v121, %v119
  %v150 = vpack.c.b16 %v122, %v120
  %v151 = vpack.c.b16 %v125, %v123
  %v152 = vpack.c.b16 %v126, %v124
  %v153 = vpack.c.b16 %v129, %v127
  %v154 = vpack.c.b16 %v130, %v128
  %v155 = vpack.c.b16 %v133, %v131
  %v156 = vpack.c.b16 %v134, %v132
  %v157 = vpack.c.b16 %v137, %v135
  %v158 = vpack.c.b16 %v138, %v136
  %v159 = vpack.c.b16 %v141, %v139
  %v160 = vpack.c.b16 %v142, %v140
  %v161 = vpack.c.b16 %v145, %v143
  %v162 = vpack.c.b16 %v146, %v144
  %179 = vmatpush.bf16.msra.mxu0 %v161
  %180 = vmatpush.bf16.msra.mxu0 %v159
  %181 = vmatpush.bf16.msra.mxu0 %v157
  %182 = vmatpush.bf16.msra.mxu0 %v155
  %183 = vmatpush.bf16.msra.mxu0 %v153
  %184 = vmatpush.bf16.msra.mxu0 %v151
  %185 = vmatpush.bf16.msra.mxu0 %v149
  %186 = vmatpush.bf16.msra.mxu0 %v147
  %187 = vmatmul.bf16.gmra.mxu0 %v76
  %v188 = vpop.f32.mrf.mxu0
  %v189 = vadd.f32 %v95, %v188
  %v190 = vpop.f32.mrf.mxu0
  %v191 = vadd.f32 %v95, %v190
  %192 = vdwg.mxu0
  %193 = vmatpush.bf16.msra.mxu0 %v162
  %194 = vmatpush.bf16.msra.mxu0 %v160
  %195 = vmatpush.bf16.msra.mxu0 %v158
  %196 = vmatpush.bf16.msra.mxu0 %v156
  %197 = vmatpush.bf16.msra.mxu0 %v154
  %198 = vmatpush.bf16.msra.mxu0 %v152
  %199 = vmatpush.bf16.msra.mxu0 %v150
  %200 = vmatpush.bf16.msra.mxu0 %v148
  %201 = vmatmul.bf16.gmra.mxu0 %v76
  %v202 = vpop.f32.mrf.mxu0
  %v203 = vadd.f32 %v96, %v202
  %v204 = vpop.f32.mrf.mxu0
  %v205 = vadd.f32 %v96, %v204
  %206 = vdwg.mxu0
  %v207 = vpack.c.bf16 %v61, %v60
  %v208 = vld [vmem:[%s6] sm:$0xf]
  %v209 = vld [vmem:[%s6 + $0x4] sm:$0xf]
  %v210 = vld [vmem:[%s6 + $0x8] sm:$0xf]
  %v211 = vld [vmem:[%s6 + $0xc] sm:$0xf]
  %v212 = vld [vmem:[%s6 + $0x10] sm:$0xf]
  %v213 = vld [vmem:[%s6 + $0x14] sm:$0xf]
  %v214 = vld [vmem:[%s6 + $0x18] sm:$0xf]
  %v215 = vld [vmem:[%s6 + $0x1c] sm:$0xf]
  %v216 = vld [vmem:[%s6 + $0x20] sm:$0xf]
  %v217 = vld [vmem:[%s6 + $0x24] sm:$0xf]
  %v218 = vld [vmem:[%s6 + $0x28] sm:$0xf]
  %v219 = vld [vmem:[%s6 + $0x2c] sm:$0xf]
  %v220 = vld [vmem:[%s6 + $0x30] sm:$0xf]
  %v221 = vld [vmem:[%s6 + $0x34] sm:$0xf]
  %v222 = vld [vmem:[%s6 + $0x38] sm:$0xf]
  %v223 = vld [vmem:[%s6 + $0x3c] sm:$0xf]
  %v224 = vld [vmem:[%s7] sm:$0x1]
  %v226 = vperm.slane %v224, 0
  %v244 = vunpack.c.l.b16 %v208
  %v245 = vunpack.c.l.b16 %v209
  %v246 = vunpack.c.l.b16 %v210
  %v247 = vunpack.c.l.b16 %v211
  %v248 = vunpack.c.l.b16 %v212
  %v249 = vunpack.c.l.b16 %v213
  %v250 = vunpack.c.l.b16 %v214
  %v251 = vunpack.c.l.b16 %v215
  %v252 = vunpack.c.l.b16 %v216
  %v253 = vunpack.c.l.b16 %v217
  %v254 = vunpack.c.l.b16 %v218
  %v255 = vunpack.c.l.b16 %v219
  %v256 = vunpack.c.l.b16 %v220
  %v257 = vunpack.c.l.b16 %v221
  %v258 = vunpack.c.l.b16 %v222
  %v259 = vunpack.c.l.b16 %v223
  %v260 = vpack.c.b16 %v245, %v244
  %v261 = vpack.c.b16 %v247, %v246
  %v262 = vpack.c.b16 %v249, %v248
  %v263 = vpack.c.b16 %v251, %v250
  %v264 = vpack.c.b16 %v253, %v252
  %v265 = vpack.c.b16 %v255, %v254
  %v266 = vpack.c.b16 %v257, %v256
  %v267 = vpack.c.b16 %v259, %v258
  %276 = vmatpush.bf16.msra.mxu0 %v267
  %277 = vmatpush.bf16.msra.mxu0 %v266
  %278 = vmatpush.bf16.msra.mxu0 %v265
  %279 = vmatpush.bf16.msra.mxu0 %v264
  %280 = vmatpush.bf16.msra.mxu0 %v263
  %281 = vmatpush.bf16.msra.mxu0 %v262
  %282 = vmatpush.bf16.msra.mxu0 %v261
  %283 = vmatpush.bf16.msra.mxu0 %v260
  %284 = vmatmul.bf16.gmra.mxu0 %v207
  %v285 = vpop.f32.mrf.mxu0
  %v286 = vadd.f32 %v226, %v285
  %v287 = vpop.f32.mrf.mxu0
  %v288 = vadd.f32 %v226, %v287
  %289 = vdwg.mxu0
  %290 = vxpose.xlu0.b32.start [1/16] %v189, 128
  %291 = vxpose.xlu0.b32.cont [2/16] %v191, 128
  %292 = vxpose.xlu0.b32.cont [3/16] 0.0, 128
  %293 = vxpose.xlu0.b32.cont [4/16] 0.0, 128
  %294 = vxpose.xlu0.b32.cont [5/16] 0.0, 128
  %295 = vxpose.xlu0.b32.cont [6/16] 0.0, 128
  %296 = vxpose.xlu0.b32.cont [7/16] 0.0, 128
  %297 = vxpose.xlu0.b32.cont [8/16] 0.0, 128
  %298 = vxpose.xlu0.b32.cont [9/16] 0.0, 128
  %299 = vxpose.xlu0.b32.cont [10/16] 0.0, 128
  %300 = vxpose.xlu0.b32.cont [11/16] 0.0, 128
  %301 = vxpose.xlu0.b32.cont [12/16] 0.0, 128
  %302 = vxpose.xlu0.b32.cont [13/16] 0.0, 128
  %303 = vxpose.xlu0.b32.cont [14/16] 0.0, 128
  %304 = vxpose.xlu0.b32.cont [15/16] 0.0, 128
  %305 = vxpose.xlu0.b32.end [16/16] 0.0, 128
  %v306 = vpop.trf.xlu0
  %v307 = vpop.trf.xlu0
  %v308 = vpop.trf.xlu0
  %v309 = vpop.trf.xlu0
  %v310 = vpop.trf.xlu0
  %v311 = vpop.trf.xlu0
  %v312 = vpop.trf.xlu0
  %v313 = vpop.trf.xlu0
  %v314 = vpop.trf.xlu0
  %v315 = vpop.trf.xlu0
  %v316 = vpop.trf.xlu0
  %v317 = vpop.trf.xlu0
  %v318 = vpop.trf.xlu0
  %v319 = vpop.trf.xlu0
  %v320 = vpop.trf.xlu0
  %v321 = vpop.trf.xlu0
  %322 = vxpose.xlu0.b32.start [1/16] %v203, 128
  %323 = vxpose.xlu0.b32.cont [2/16] %v205, 128
  %324 = vxpose.xlu0.b32.cont [3/16] 0.0, 128
  %325 = vxpose.xlu0.b32.cont [4/16] 0.0, 128
  %326 = vxpose.xlu0.b32.cont [5/16] 0.0, 128
  %327 = vxpose.xlu0.b32.cont [6/16] 0.0, 128
  %328 = vxpose.xlu0.b32.cont [7/16] 0.0, 128
  %329 = vxpose.xlu0.b32.cont [8/16] 0.0, 128
  %330 = vxpose.xlu0.b32.cont [9/16] 0.0, 128
  %331 = vxpose.xlu0.b32.cont [10/16] 0.0, 128
  %332 = vxpose.xlu0.b32.cont [11/16] 0.0, 128
  %333 = vxpose.xlu0.b32.cont [12/16] 0.0, 128
  %334 = vxpose.xlu0.b32.cont [13/16] 0.0, 128
  %335 = vxpose.xlu0.b32.cont [14/16] 0.0, 128
  %336 = vxpose.xlu0.b32.cont [15/16] 0.0, 128
  %337 = vxpose.xlu0.b32.end [16/16] 0.0, 128
  %v338 = vpop.trf.xlu0
  %v339 = vpop.trf.xlu0
  %v340 = vpop.trf.xlu0
  %v341 = vpop.trf.xlu0
  %v342 = vpop.trf.xlu0
  %v343 = vpop.trf.xlu0
  %v344 = vpop.trf.xlu0
  %v345 = vpop.trf.xlu0
  %v346 = vpop.trf.xlu0
  %v347 = vpop.trf.xlu0
  %v348 = vpop.trf.xlu0
  %v349 = vpop.trf.xlu0
  %v350 = vpop.trf.xlu0
  %v351 = vpop.trf.xlu0
  %v352 = vpop.trf.xlu0
  %v353 = vpop.trf.xlu0
  %354 = vxpose.xlu0.b32.start [1/16] %v286, 128
  %355 = vxpose.xlu0.b32.cont [2/16] %v288, 128
  %356 = vxpose.xlu0.b32.cont [3/16] 0.0, 128
  %357 = vxpose.xlu0.b32.cont [4/16] 0.0, 128
  %358 = vxpose.xlu0.b32.cont [5/16] 0.0, 128
  %359 = vxpose.xlu0.b32.cont [6/16] 0.0, 128
  %360 = vxpose.xlu0.b32.cont [7/16] 0.0, 128
  %361 = vxpose.xlu0.b32.cont [8/16] 0.0, 128
  %362 = vxpose.xlu0.b32.cont [9/16] 0.0, 128
  %363 = vxpose.xlu0.b32.cont [10/16] 0.0, 128
  %364 = vxpose.xlu0.b32.cont [11/16] 0.0, 128
  %365 = vxpose.xlu0.b32.cont [12/16] 0.0, 128
  %366 = vxpose.xlu0.b32.cont [13/16] 0.0, 128
  %367 = vxpose.xlu0.b32.cont [14/16] 0.0, 128
  %368 = vxpose.xlu0.b32.cont [15/16] 0.0, 128
  %369 = vxpose.xlu0.b32.end [16/16] 0.0, 128
  %v370 = vpop.trf.xlu0
  %v371 = vpop.trf.xlu0
  %v372 = vpop.trf.xlu0
  %v373 = vpop.trf.xlu0
  %v374 = vpop.trf.xlu0
  %v375 = vpop.trf.xlu0
  %v376 = vpop.trf.xlu0
  %v377 = vpop.trf.xlu0
  %v378 = vpop.trf.xlu0
  %v379 = vpop.trf.xlu0
  %v380 = vpop.trf.xlu0
  %v381 = vpop.trf.xlu0
  %v382 = vpop.trf.xlu0
  %v383 = vpop.trf.xlu0
  %v384 = vpop.trf.xlu0
  %v385 = vpop.trf.xlu0
  %386 = vxpose.xlu0.b32.start [1/16] %v306, 128
  %387 = vxpose.xlu0.b32.cont [2/16] %v307, 128
  %388 = vxpose.xlu0.b32.cont [3/16] 0.0, 128
  %389 = vxpose.xlu0.b32.cont [4/16] 0.0, 128
  %390 = vxpose.xlu0.b32.cont [5/16] 0.0, 128
  %391 = vxpose.xlu0.b32.cont [6/16] 0.0, 128
  %392 = vxpose.xlu0.b32.cont [7/16] 0.0, 128
  %393 = vxpose.xlu0.b32.cont [8/16] 0.0, 128
  %394 = vxpose.xlu0.b32.cont [9/16] 0.0, 128
  %395 = vxpose.xlu0.b32.cont [10/16] 0.0, 128
  %396 = vxpose.xlu0.b32.cont [11/16] 0.0, 128
  %397 = vxpose.xlu0.b32.cont [12/16] 0.0, 128
  %398 = vxpose.xlu0.b32.cont [13/16] 0.0, 128
  %399 = vxpose.xlu0.b32.cont [14/16] 0.0, 128
  %400 = vxpose.xlu0.b32.cont [15/16] 0.0, 128
  %401 = vxpose.xlu0.b32.end [16/16] 0.0, 128
  %v402 = vpop.trf.xlu0
  %v403 = vpop.trf.xlu0
  %v404 = vpop.trf.xlu0
  %v405 = vpop.trf.xlu0
  %v406 = vpop.trf.xlu0
  %v407 = vpop.trf.xlu0
  %v408 = vpop.trf.xlu0
  %v409 = vpop.trf.xlu0
  %v410 = vpop.trf.xlu0
  %v411 = vpop.trf.xlu0
  %v412 = vpop.trf.xlu0
  %v413 = vpop.trf.xlu0
  %v414 = vpop.trf.xlu0
  %v415 = vpop.trf.xlu0
  %v416 = vpop.trf.xlu0
  %v417 = vpop.trf.xlu0
  %418 = vxpose.xlu0.b32.start [1/16] %v308, 128
  %419 = vxpose.xlu0.b32.cont [2/16] %v309, 128
  %420 = vxpose.xlu0.b32.cont [3/16] 0.0, 128
  %421 = vxpose.xlu0.b32.cont [4/16] 0.0, 128
  %422 = vxpose.xlu0.b32.cont [5/16] 0.0, 128
  %423 = vxpose.xlu0.b32.cont [6/16] 0.0, 128
  %424 = vxpose.xlu0.b32.cont [7/16] 0.0, 128
  %425 = vxpose.xlu0.b32.cont [8/16] 0.0, 128
  %426 = vxpose.xlu0.b32.cont [9/16] 0.0, 128
  %427 = vxpose.xlu0.b32.cont [10/16] 0.0, 128
  %428 = vxpose.xlu0.b32.cont [11/16] 0.0, 128
  %429 = vxpose.xlu0.b32.cont [12/16] 0.0, 128
  %430 = vxpose.xlu0.b32.cont [13/16] 0.0, 128
  %431 = vxpose.xlu0.b32.cont [14/16] 0.0, 128
  %432 = vxpose.xlu0.b32.cont [15/16] 0.0, 128
  %433 = vxpose.xlu0.b32.end [16/16] 0.0, 128
  %v434 = vpop.trf.xlu0
  %v435 = vpop.trf.xlu0
  %v436 = vpop.trf.xlu0
  %v437 = vpop.trf.xlu0
  %v438 = vpop.trf.xlu0
  %v439 = vpop.trf.xlu0
  %v440 = vpop.trf.xlu0
  %v441 = vpop.trf.xlu0
  %v442 = vpop.trf.xlu0
  %v443 = vpop.trf.xlu0
  %v444 = vpop.trf.xlu0
  %v445 = vpop.trf.xlu0
  %v446 = vpop.trf.xlu0
  %v447 = vpop.trf.xlu0
  %v448 = vpop.trf.xlu0
  %v449 = vpop.trf.xlu0
  %450 = vxpose.xlu0.b32.start [1/16] %v310, 128
  %451 = vxpose.xlu0.b32.cont [2/16] %v311, 128
  %452 = vxpose.xlu0.b32.cont [3/16] 0.0, 128
  %453 = vxpose.xlu0.b32.cont [4/16] 0.0, 128
  %454 = vxpose.xlu0.b32.cont [5/16] 0.0, 128
  %455 = vxpose.xlu0.b32.cont [6/16] 0.0, 128
  %456 = vxpose.xlu0.b32.cont [7/16] 0.0, 128
  %457 = vxpose.xlu0.b32.cont [8/16] 0.0, 128
  %458 = vxpose.xlu0.b32.cont [9/16] 0.0, 128
  %459 = vxpose.xlu0.b32.cont [10/16] 0.0, 128
  %460 = vxpose.xlu0.b32.cont [11/16] 0.0, 128
  %461 = vxpose.xlu0.b32.cont [12/16] 0.0, 128
  %462 = vxpose.xlu0.b32.cont [13/16] 0.0, 128
  %463 = vxpose.xlu0.b32.cont [14/16] 0.0, 128
  %464 = vxpose.xlu0.b32.cont [15/16] 0.0, 128
  %465 = vxpose.xlu0.b32.end [16/16] 0.0, 128
  %v466 = vpop.trf.xlu0
  %v467 = vpop.trf.xlu0
  %v468 = vpop.trf.xlu0
  %v469 = vpop.trf.xlu0
  %v470 = vpop.trf.xlu0
  %v471 = vpop.trf.xlu0
  %v472 = vpop.trf.xlu0
  %v473 = vpop.trf.xlu0
  %v474 = vpop.trf.xlu0
  %v475 = vpop.trf.xlu0
  %v476 = vpop.trf.xlu0
  %v477 = vpop.trf.xlu0
  %v478 = vpop.trf.xlu0
  %v479 = vpop.trf.xlu0
  %v480 = vpop.trf.xlu0
  %v481 = vpop.trf.xlu0
  %482 = vxpose.xlu0.b32.start [1/16] %v312, 128
  %483 = vxpose.xlu0.b32.cont [2/16] %v313, 128
  %484 = vxpose.xlu0.b32.cont [3/16] 0.0, 128
  %485 = vxpose.xlu0.b32.cont [4/16] 0.0, 128
  %486 = vxpose.xlu0.b32.cont [5/16] 0.0, 128
  %487 = vxpose.xlu0.b32.cont [6/16] 0.0, 128
  %488 = vxpose.xlu0.b32.cont [7/16] 0.0, 128
  %489 = vxpose.xlu0.b32.cont [8/16] 0.0, 128
  %490 = vxpose.xlu0.b32.cont [9/16] 0.0, 128
  %491 = vxpose.xlu0.b32.cont [10/16] 0.0, 128
  %492 = vxpose.xlu0.b32.cont [11/16] 0.0, 128
  %493 = vxpose.xlu0.b32.cont [12/16] 0.0, 128
  %494 = vxpose.xlu0.b32.cont [13/16] 0.0, 128
  %495 = vxpose.xlu0.b32.cont [14/16] 0.0, 128
  %496 = vxpose.xlu0.b32.cont [15/16] 0.0, 128
  %497 = vxpose.xlu0.b32.end [16/16] 0.0, 128
  %v498 = vpop.trf.xlu0
  %v499 = vpop.trf.xlu0
  %v500 = vpop.trf.xlu0
  %v501 = vpop.trf.xlu0
  %v502 = vpop.trf.xlu0
  %v503 = vpop.trf.xlu0
  %v504 = vpop.trf.xlu0
  %v505 = vpop.trf.xlu0
  %v506 = vpop.trf.xlu0
  %v507 = vpop.trf.xlu0
  %v508 = vpop.trf.xlu0
  %v509 = vpop.trf.xlu0
  %v510 = vpop.trf.xlu0
  %v511 = vpop.trf.xlu0
  %v512 = vpop.trf.xlu0
  %v513 = vpop.trf.xlu0
  %514 = vxpose.xlu0.b32.start [1/16] %v314, 128
  %515 = vxpose.xlu0.b32.cont [2/16] %v315, 128
  %516 = vxpose.xlu0.b32.cont [3/16] 0.0, 128
  %517 = vxpose.xlu0.b32.cont [4/16] 0.0, 128
  %518 = vxpose.xlu0.b32.cont [5/16] 0.0, 128
  %519 = vxpose.xlu0.b32.cont [6/16] 0.0, 128
  %520 = vxpose.xlu0.b32.cont [7/16] 0.0, 128
  %521 = vxpose.xlu0.b32.cont [8/16] 0.0, 128
  %522 = vxpose.xlu0.b32.cont [9/16] 0.0, 128
  %523 = vxpose.xlu0.b32.cont [10/16] 0.0, 128
  %524 = vxpose.xlu0.b32.cont [11/16] 0.0, 128
  %525 = vxpose.xlu0.b32.cont [12/16] 0.0, 128
  %526 = vxpose.xlu0.b32.cont [13/16] 0.0, 128
  %527 = vxpose.xlu0.b32.cont [14/16] 0.0, 128
  %528 = vxpose.xlu0.b32.cont [15/16] 0.0, 128
  %529 = vxpose.xlu0.b32.end [16/16] 0.0, 128
  %v530 = vpop.trf.xlu0
  %v531 = vpop.trf.xlu0
  %v532 = vpop.trf.xlu0
  %v533 = vpop.trf.xlu0
  %v534 = vpop.trf.xlu0
  %v535 = vpop.trf.xlu0
  %v536 = vpop.trf.xlu0
  %v537 = vpop.trf.xlu0
  %v538 = vpop.trf.xlu0
  %v539 = vpop.trf.xlu0
  %v540 = vpop.trf.xlu0
  %v541 = vpop.trf.xlu0
  %v542 = vpop.trf.xlu0
  %v543 = vpop.trf.xlu0
  %v544 = vpop.trf.xlu0
  %v545 = vpop.trf.xlu0
  %546 = vxpose.xlu0.b32.start [1/16] %v316, 128
  %547 = vxpose.xlu0.b32.cont [2/16] %v317, 128
  %548 = vxpose.xlu0.b32.cont [3/16] 0.0, 128
  %549 = vxpose.xlu0.b32.cont [4/16] 0.0, 128
  %550 = vxpose.xlu0.b32.cont [5/16] 0.0, 128
  %551 = vxpose.xlu0.b32.cont [6/16] 0.0, 128
  %552 = vxpose.xlu0.b32.cont [7/16] 0.0, 128
  %553 = vxpose.xlu0.b32.cont [8/16] 0.0, 128
  %554 = vxpose.xlu0.b32.cont [9/16] 0.0, 128
  %555 = vxpose.xlu0.b32.cont [10/16] 0.0, 128
  %556 = vxpose.xlu0.b32.cont [11/16] 0.0, 128
  %557 = vxpose.xlu0.b32.cont [12/16] 0.0, 128
  %558 = vxpose.xlu0.b32.cont [13/16] 0.0, 128
  %559 = vxpose.xlu0.b32.cont [14/16] 0.0, 128
  %560 = vxpose.xlu0.b32.cont [15/16] 0.0, 128
  %561 = vxpose.xlu0.b32.end [16/16] 0.0, 128
  %v562 = vpop.trf.xlu0
  %v563 = vpop.trf.xlu0
  %v564 = vpop.trf.xlu0
  %v565 = vpop.trf.xlu0
  %v566 = vpop.trf.xlu0
  %v567 = vpop.trf.xlu0
  %v568 = vpop.trf.xlu0
  %v569 = vpop.trf.xlu0
  %v570 = vpop.trf.xlu0
  %v571 = vpop.trf.xlu0
  %v572 = vpop.trf.xlu0
  %v573 = vpop.trf.xlu0
  %v574 = vpop.trf.xlu0
  %v575 = vpop.trf.xlu0
  %v576 = vpop.trf.xlu0
  %v577 = vpop.trf.xlu0
  %578 = vxpose.xlu0.b32.start [1/16] %v318, 128
  %579 = vxpose.xlu0.b32.cont [2/16] %v319, 128
  %580 = vxpose.xlu0.b32.cont [3/16] 0.0, 128
  %581 = vxpose.xlu0.b32.cont [4/16] 0.0, 128
  %582 = vxpose.xlu0.b32.cont [5/16] 0.0, 128
  %583 = vxpose.xlu0.b32.cont [6/16] 0.0, 128
  %584 = vxpose.xlu0.b32.cont [7/16] 0.0, 128
  %585 = vxpose.xlu0.b32.cont [8/16] 0.0, 128
  %586 = vxpose.xlu0.b32.cont [9/16] 0.0, 128
  %587 = vxpose.xlu0.b32.cont [10/16] 0.0, 128
  %588 = vxpose.xlu0.b32.cont [11/16] 0.0, 128
  %589 = vxpose.xlu0.b32.cont [12/16] 0.0, 128
  %590 = vxpose.xlu0.b32.cont [13/16] 0.0, 128
  %591 = vxpose.xlu0.b32.cont [14/16] 0.0, 128
  %592 = vxpose.xlu0.b32.cont [15/16] 0.0, 128
  %593 = vxpose.xlu0.b32.end [16/16] 0.0, 128
  %v594 = vpop.trf.xlu0
  %v595 = vpop.trf.xlu0
  %v596 = vpop.trf.xlu0
  %v597 = vpop.trf.xlu0
  %v598 = vpop.trf.xlu0
  %v599 = vpop.trf.xlu0
  %v600 = vpop.trf.xlu0
  %v601 = vpop.trf.xlu0
  %v602 = vpop.trf.xlu0
  %v603 = vpop.trf.xlu0
  %v604 = vpop.trf.xlu0
  %v605 = vpop.trf.xlu0
  %v606 = vpop.trf.xlu0
  %v607 = vpop.trf.xlu0
  %v608 = vpop.trf.xlu0
  %v609 = vpop.trf.xlu0
  %610 = vxpose.xlu0.b32.start [1/16] %v320, 128
  %611 = vxpose.xlu0.b32.cont [2/16] %v321, 128
  %612 = vxpose.xlu0.b32.cont [3/16] 0.0, 128
  %613 = vxpose.xlu0.b32.cont [4/16] 0.0, 128
  %614 = vxpose.xlu0.b32.cont [5/16] 0.0, 128
  %615 = vxpose.xlu0.b32.cont [6/16] 0.0, 128
  %616 = vxpose.xlu0.b32.cont [7/16] 0.0, 128
  %617 = vxpose.xlu0.b32.cont [8/16] 0.0, 128
  %618 = vxpose.xlu0.b32.cont [9/16] 0.0, 128
  %619 = vxpose.xlu0.b32.cont [10/16] 0.0, 128
  %620 = vxpose.xlu0.b32.cont [11/16] 0.0, 128
  %621 = vxpose.xlu0.b32.cont [12/16] 0.0, 128
  %622 = vxpose.xlu0.b32.cont [13/16] 0.0, 128
  %623 = vxpose.xlu0.b32.cont [14/16] 0.0, 128
  %624 = vxpose.xlu0.b32.cont [15/16] 0.0, 128
  %625 = vxpose.xlu0.b32.end [16/16] 0.0, 128
  %v626 = vpop.trf.xlu0
  %v627 = vpop.trf.xlu0
  %v628 = vpop.trf.xlu0
  %v629 = vpop.trf.xlu0
  %v630 = vpop.trf.xlu0
  %v631 = vpop.trf.xlu0
  %v632 = vpop.trf.xlu0
  %v633 = vpop.trf.xlu0
  %v634 = vpop.trf.xlu0
  %v635 = vpop.trf.xlu0
  %v636 = vpop.trf.xlu0
  %v637 = vpop.trf.xlu0
  %v638 = vpop.trf.xlu0
  %v639 = vpop.trf.xlu0
  %v640 = vpop.trf.xlu0
  %v641 = vpop.trf.xlu0
  %v642 = vld [vmem:[%s3] sm:$0xff]
  %v643 = vld [vmem:[%s3 + $0x8] sm:$0xff]
  %vm644 = vcmask 130048
  %v646 = vsel %vm644, %v402, 0
  %v649 = vsel %vm644, %v403, 0
  %651 = vmatpush.msra.mxu0 0.0
  %652 = vmatpush.msra.mxu0 0.0
  %653 = vmatpush.msra.mxu0 0.0
  %654 = vmatpush.msra.mxu0 0.0
  %655 = vmatpush.msra.mxu0 0.0
  %656 = vmatpush.msra.mxu0 0.0
  %657 = vmatpush.msra.mxu0 0.0
  %658 = vmatpush.msra.mxu0 0.0
  %659 = vmatpush.msra.mxu0 0.0
  %660 = vmatpush.msra.mxu0 0.0
  %661 = vmatpush.msra.mxu0 0.0
  %662 = vmatpush.msra.mxu0 0.0
  %663 = vmatpush.msra.mxu0 0.0
  %664 = vmatpush.msra.mxu0 0.0
  %665 = vmatpush.msra.mxu0 %v339
  %666 = vmatpush.msra.mxu0 %v338
  %667 = vmatmul.f32.gmra.mxu0 %v646
  %v668 = vpop.f32.mrf.mxu0
  %v669 = vadd.f32 %v642, %v668
  %670 = vmatmul.f32.gmra.mxu0 %v649
  %v671 = vpop.f32.mrf.mxu0
  %v672 = vadd.f32 %v643, %v671
  %673 = vdwg.mxu0
  %v675 = vsel %vm644, %v434, 0
  %v678 = vsel %vm644, %v435, 0
  %680 = vmatpush.msra.mxu0 0.0
  %681 = vmatpush.msra.mxu0 0.0
  %682 = vmatpush.msra.mxu0 0.0
  %683 = vmatpush.msra.mxu0 0.0
  %684 = vmatpush.msra.mxu0 0.0
  %685 = vmatpush.msra.mxu0 0.0
  %686 = vmatpush.msra.mxu0 0.0
  %687 = vmatpush.msra.mxu0 0.0
  %688 = vmatpush.msra.mxu0 0.0
  %689 = vmatpush.msra.mxu0 0.0
  %690 = vmatpush.msra.mxu0 0.0
  %691 = vmatpush.msra.mxu0 0.0
  %692 = vmatpush.msra.mxu0 0.0
  %693 = vmatpush.msra.mxu0 0.0
  %694 = vmatpush.msra.mxu0 %v341
  %695 = vmatpush.msra.mxu0 %v340
  %696 = vmatmul.f32.gmra.mxu0 %v675
  %v697 = vpop.f32.mrf.mxu0
  %v698 = vadd.f32 %v642, %v697
  %699 = vmatmul.f32.gmra.mxu0 %v678
  %v700 = vpop.f32.mrf.mxu0
  %v701 = vadd.f32 %v643, %v700
  %702 = vdwg.mxu0
  %v704 = vsel %vm644, %v466, 0
  %v707 = vsel %vm644, %v467, 0
  %709 = vmatpush.msra.mxu0 0.0
  %710 = vmatpush.msra.mxu0 0.0
  %711 = vmatpush.msra.mxu0 0.0
  %712 = vmatpush.msra.mxu0 0.0
  %713 = vmatpush.msra.mxu0 0.0
  %714 = vmatpush.msra.mxu0 0.0
  %715 = vmatpush.msra.mxu0 0.0
  %716 = vmatpush.msra.mxu0 0.0
  %717 = vmatpush.msra.mxu0 0.0
  %718 = vmatpush.msra.mxu0 0.0
  %719 = vmatpush.msra.mxu0 0.0
  %720 = vmatpush.msra.mxu0 0.0
  %721 = vmatpush.msra.mxu0 0.0
  %722 = vmatpush.msra.mxu0 0.0
  %723 = vmatpush.msra.mxu0 %v343
  %724 = vmatpush.msra.mxu0 %v342
  %725 = vmatmul.f32.gmra.mxu0 %v704
  %v726 = vpop.f32.mrf.mxu0
  %v727 = vadd.f32 %v642, %v726
  %728 = vmatmul.f32.gmra.mxu0 %v707
  %v729 = vpop.f32.mrf.mxu0
  %v730 = vadd.f32 %v643, %v729
  %731 = vdwg.mxu0
  %v733 = vsel %vm644, %v498, 0
  %v736 = vsel %vm644, %v499, 0
  %738 = vmatpush.msra.mxu0 0.0
  %739 = vmatpush.msra.mxu0 0.0
  %740 = vmatpush.msra.mxu0 0.0
  %741 = vmatpush.msra.mxu0 0.0
  %742 = vmatpush.msra.mxu0 0.0
  %743 = vmatpush.msra.mxu0 0.0
  %744 = vmatpush.msra.mxu0 0.0
  %745 = vmatpush.msra.mxu0 0.0
  %746 = vmatpush.msra.mxu0 0.0
  %747 = vmatpush.msra.mxu0 0.0
  %748 = vmatpush.msra.mxu0 0.0
  %749 = vmatpush.msra.mxu0 0.0
  %750 = vmatpush.msra.mxu0 0.0
  %751 = vmatpush.msra.mxu0 0.0
  %752 = vmatpush.msra.mxu0 %v345
  %753 = vmatpush.msra.mxu0 %v344
  %754 = vmatmul.f32.gmra.mxu0 %v733
  %v755 = vpop.f32.mrf.mxu0
  %v756 = vadd.f32 %v642, %v755
  %757 = vmatmul.f32.gmra.mxu0 %v736
  %v758 = vpop.f32.mrf.mxu0
  %v759 = vadd.f32 %v643, %v758
  %760 = vdwg.mxu0
  %v762 = vsel %vm644, %v530, 0
  %v765 = vsel %vm644, %v531, 0
  %767 = vmatpush.msra.mxu0 0.0
  %768 = vmatpush.msra.mxu0 0.0
  %769 = vmatpush.msra.mxu0 0.0
  %770 = vmatpush.msra.mxu0 0.0
  %771 = vmatpush.msra.mxu0 0.0
  %772 = vmatpush.msra.mxu0 0.0
  %773 = vmatpush.msra.mxu0 0.0
  %774 = vmatpush.msra.mxu0 0.0
  %775 = vmatpush.msra.mxu0 0.0
  %776 = vmatpush.msra.mxu0 0.0
  %777 = vmatpush.msra.mxu0 0.0
  %778 = vmatpush.msra.mxu0 0.0
  %779 = vmatpush.msra.mxu0 0.0
  %780 = vmatpush.msra.mxu0 0.0
  %781 = vmatpush.msra.mxu0 %v347
  %782 = vmatpush.msra.mxu0 %v346
  %783 = vmatmul.f32.gmra.mxu0 %v762
  %v784 = vpop.f32.mrf.mxu0
  %v785 = vadd.f32 %v642, %v784
  %786 = vmatmul.f32.gmra.mxu0 %v765
  %v787 = vpop.f32.mrf.mxu0
  %v788 = vadd.f32 %v643, %v787
  %789 = vdwg.mxu0
  %v791 = vsel %vm644, %v562, 0
  %v794 = vsel %vm644, %v563, 0
  %796 = vmatpush.msra.mxu0 0.0
  %797 = vmatpush.msra.mxu0 0.0
  %798 = vmatpush.msra.mxu0 0.0
  %799 = vmatpush.msra.mxu0 0.0
  %800 = vmatpush.msra.mxu0 0.0
  %801 = vmatpush.msra.mxu0 0.0
  %802 = vmatpush.msra.mxu0 0.0
  %803 = vmatpush.msra.mxu0 0.0
  %804 = vmatpush.msra.mxu0 0.0
  %805 = vmatpush.msra.mxu0 0.0
  %806 = vmatpush.msra.mxu0 0.0
  %807 = vmatpush.msra.mxu0 0.0
  %808 = vmatpush.msra.mxu0 0.0
  %809 = vmatpush.msra.mxu0 0.0
  %810 = vmatpush.msra.mxu0 %v349
  %811 = vmatpush.msra.mxu0 %v348
  %812 = vmatmul.f32.gmra.mxu0 %v791
  %v813 = vpop.f32.mrf.mxu0
  %v814 = vadd.f32 %v642, %v813
  %815 = vmatmul.f32.gmra.mxu0 %v794
  %v816 = vpop.f32.mrf.mxu0
  %v817 = vadd.f32 %v643, %v816
  %818 = vdwg.mxu0
  %v820 = vsel %vm644, %v594, 0
  %v823 = vsel %vm644, %v595, 0
  %825 = vmatpush.msra.mxu0 0.0
  %826 = vmatpush.msra.mxu0 0.0
  %827 = vmatpush.msra.mxu0 0.0
  %828 = vmatpush.msra.mxu0 0.0
  %829 = vmatpush.msra.mxu0 0.0
  %830 = vmatpush.msra.mxu0 0.0
  %831 = vmatpush.msra.mxu0 0.0
  %832 = vmatpush.msra.mxu0 0.0
  %833 = vmatpush.msra.mxu0 0.0
  %834 = vmatpush.msra.mxu0 0.0
  %835 = vmatpush.msra.mxu0 0.0
  %836 = vmatpush.msra.mxu0 0.0
  %837 = vmatpush.msra.mxu0 0.0
  %838 = vmatpush.msra.mxu0 0.0
  %839 = vmatpush.msra.mxu0 %v351
  %840 = vmatpush.msra.mxu0 %v350
  %841 = vmatmul.f32.gmra.mxu0 %v820
  %v842 = vpop.f32.mrf.mxu0
  %v843 = vadd.f32 %v642, %v842
  %844 = vmatmul.f32.gmra.mxu0 %v823
  %v845 = vpop.f32.mrf.mxu0
  %v846 = vadd.f32 %v643, %v845
  %847 = vdwg.mxu0
  %v849 = vsel %vm644, %v626, 0
  %v852 = vsel %vm644, %v627, 0
  %854 = vmatpush.msra.mxu0 0.0
  %855 = vmatpush.msra.mxu0 0.0
  %856 = vmatpush.msra.mxu0 0.0
  %857 = vmatpush.msra.mxu0 0.0
  %858 = vmatpush.msra.mxu0 0.0
  %859 = vmatpush.msra.mxu0 0.0
  %860 = vmatpush.msra.mxu0 0.0
  %861 = vmatpush.msra.mxu0 0.0
  %862 = vmatpush.msra.mxu0 0.0
  %863 = vmatpush.msra.mxu0 0.0
  %864 = vmatpush.msra.mxu0 0.0
  %865 = vmatpush.msra.mxu0 0.0
  %866 = vmatpush.msra.mxu0 0.0
  %867 = vmatpush.msra.mxu0 0.0
  %868 = vmatpush.msra.mxu0 %v353
  %869 = vmatpush.msra.mxu0 %v352
  %870 = vmatmul.f32.gmra.mxu0 %v849
  %v871 = vpop.f32.mrf.mxu0
  %v872 = vadd.f32 %v642, %v871
  %873 = vmatmul.f32.gmra.mxu0 %v852
  %v874 = vpop.f32.mrf.mxu0
  %v875 = vadd.f32 %v643, %v874
  %876 = vdwg.mxu0
  %v877 = vsel %vm644, %v669, -inf
  %878 = vmax.xlane.f32.xlu0 %v877
  %v879 = vpop.xlane.xlu0 %878
  %v880 = vsel %vm644, %v672, -inf
  %881 = vmax.xlane.f32.xlu0 %v880
  %v882 = vpop.xlane.xlu0 %881
  %v883 = vsel %vm644, %v698, -inf
  %884 = vmax.xlane.f32.xlu0 %v883
  %v885 = vpop.xlane.xlu0 %884
  %v886 = vsel %vm644, %v701, -inf
  %887 = vmax.xlane.f32.xlu0 %v886
  %v888 = vpop.xlane.xlu0 %887
  %v889 = vsel %vm644, %v727, -inf
  %890 = vmax.xlane.f32.xlu0 %v889
  %v891 = vpop.xlane.xlu0 %890
  %v892 = vsel %vm644, %v730, -inf
  %893 = vmax.xlane.f32.xlu0 %v892
  %v894 = vpop.xlane.xlu0 %893
  %v895 = vsel %vm644, %v756, -inf
  %896 = vmax.xlane.f32.xlu0 %v895
  %v897 = vpop.xlane.xlu0 %896
  %v898 = vsel %vm644, %v759, -inf
  %899 = vmax.xlane.f32.xlu0 %v898
  %v900 = vpop.xlane.xlu0 %899
  %v901 = vsel %vm644, %v785, -inf
  %902 = vmax.xlane.f32.xlu0 %v901
  %v903 = vpop.xlane.xlu0 %902
  %v904 = vsel %vm644, %v788, -inf
  %905 = vmax.xlane.f32.xlu0 %v904
  %v906 = vpop.xlane.xlu0 %905
  %v907 = vsel %vm644, %v814, -inf
  %908 = vmax.xlane.f32.xlu0 %v907
  %v909 = vpop.xlane.xlu0 %908
  %v910 = vsel %vm644, %v817, -inf
  %911 = vmax.xlane.f32.xlu0 %v910
  %v912 = vpop.xlane.xlu0 %911
  %v913 = vsel %vm644, %v843, -inf
  %914 = vmax.xlane.f32.xlu0 %v913
  %v915 = vpop.xlane.xlu0 %914
  %v916 = vsel %vm644, %v846, -inf
  %917 = vmax.xlane.f32.xlu0 %v916
  %v918 = vpop.xlane.xlu0 %917
  %v919 = vsel %vm644, %v872, -inf
  %920 = vmax.xlane.f32.xlu0 %v919
  %v921 = vpop.xlane.xlu0 %920
  %v922 = vsel %vm644, %v875, -inf
  %923 = vmax.xlane.f32.xlu0 %v922
  %v924 = vpop.xlane.xlu0 %923
  %v925 = vsub.f32 %v669, %v879
  %v926 = vsub.f32 %v672, %v882
  %v927 = vsub.f32 %v698, %v885
  %v928 = vsub.f32 %v701, %v888
  %v929 = vsub.f32 %v727, %v891
  %v930 = vsub.f32 %v730, %v894
  %v931 = vsub.f32 %v756, %v897
  %v932 = vsub.f32 %v759, %v900
  %v933 = vsub.f32 %v785, %v903
  %v934 = vsub.f32 %v788, %v906
  %v935 = vsub.f32 %v814, %v909
  %v936 = vsub.f32 %v817, %v912
  %v937 = vsub.f32 %v843, %v915
  %v938 = vsub.f32 %v846, %v918
  %v939 = vsub.f32 %v872, %v921
  %v940 = vsub.f32 %v875, %v924
  %v941 = vmul.f32 %v925, 1.442695
  %v942 = vpow.pop %v941
  %v943 = vmul.f32 %v926, 1.442695
  %v944 = vpow.pop %v943
  %v945 = vmul.f32 %v927, 1.442695
  %v946 = vpow.pop %v945
  %v947 = vmul.f32 %v928, 1.442695
  %v948 = vpow.pop %v947
  %v949 = vmul.f32 %v929, 1.442695
  %v950 = vpow.pop %v949
  %v951 = vmul.f32 %v930, 1.442695
  %v952 = vpow.pop %v951
  %v953 = vmul.f32 %v931, 1.442695
  %v954 = vpow.pop %v953
  %v955 = vmul.f32 %v932, 1.442695
  %v956 = vpow.pop %v955
  %v957 = vmul.f32 %v933, 1.442695
  %v958 = vpow.pop %v957
  %v959 = vmul.f32 %v934, 1.442695
  %v960 = vpow.pop %v959
  %v961 = vmul.f32 %v935, 1.442695
  %v962 = vpow.pop %v961
  %v963 = vmul.f32 %v936, 1.442695
  %v964 = vpow.pop %v963
  %v965 = vmul.f32 %v937, 1.442695
  %v966 = vpow.pop %v965
  %v967 = vmul.f32 %v938, 1.442695
  %v968 = vpow.pop %v967
  %v969 = vmul.f32 %v939, 1.442695
  %v970 = vpow.pop %v969
  %v971 = vmul.f32 %v940, 1.442695
  %v972 = vpow.pop %v971
  %v973 = vsel %vm644, %v942, 0.0
  %974 = vadd.xlane.f32.xlu0 %v973
  %v975 = vpop.xlane.xlu0 %974
  %v976 = vsel %vm644, %v944, 0.0
  %977 = vadd.xlane.f32.xlu0 %v976
  %v978 = vpop.xlane.xlu0 %977
  %v979 = vsel %vm644, %v946, 0.0
  %980 = vadd.xlane.f32.xlu0 %v979
  %v981 = vpop.xlane.xlu0 %980
  %v982 = vsel %vm644, %v948, 0.0
  %983 = vadd.xlane.f32.xlu0 %v982
  %v984 = vpop.xlane.xlu0 %983
  %v985 = vsel %vm644, %v950, 0.0
  %986 = vadd.xlane.f32.xlu0 %v985
  %v987 = vpop.xlane.xlu0 %986
  %v988 = vsel %vm644, %v952, 0.0
  %989 = vadd.xlane.f32.xlu0 %v988
  %v990 = vpop.xlane.xlu0 %989
  %v991 = vsel %vm644, %v954, 0.0
  %992 = vadd.xlane.f32.xlu0 %v991
  %v993 = vpop.xlane.xlu0 %992
  %v994 = vsel %vm644, %v956, 0.0
  %995 = vadd.xlane.f32.xlu0 %v994
  %v996 = vpop.xlane.xlu0 %995
  %v997 = vsel %vm644, %v958, 0.0
  %998 = vadd.xlane.f32.xlu0 %v997
  %v999 = vpop.xlane.xlu0 %998
  %v1000 = vsel %vm644, %v960, 0.0
  %1001 = vadd.xlane.f32.xlu0 %v1000
  %v1002 = vpop.xlane.xlu0 %1001
  %v1003 = vsel %vm644, %v962, 0.0
  %1004 = vadd.xlane.f32.xlu0 %v1003
  %v1005 = vpop.xlane.xlu0 %1004
  %v1006 = vsel %vm644, %v964, 0.0
  %1007 = vadd.xlane.f32.xlu0 %v1006
  %v1008 = vpop.xlane.xlu0 %1007
  %v1009 = vsel %vm644, %v966, 0.0
  %1010 = vadd.xlane.f32.xlu0 %v1009
  %v1011 = vpop.xlane.xlu0 %1010
  %v1012 = vsel %vm644, %v968, 0.0
  %1013 = vadd.xlane.f32.xlu0 %v1012
  %v1014 = vpop.xlane.xlu0 %1013
  %v1015 = vsel %vm644, %v970, 0.0
  %1016 = vadd.xlane.f32.xlu0 %v1015
  %v1017 = vpop.xlane.xlu0 %1016
  %v1018 = vsel %vm644, %v972, 0.0
  %1019 = vadd.xlane.f32.xlu0 %v1018
  %v1020 = vpop.xlane.xlu0 %1019
  %v1021 = vrcp.pop %v975
  %v1022 = vrcp.pop %v978
  %v1023 = vrcp.pop %v981
  %v1024 = vrcp.pop %v984
  %v1025 = vrcp.pop %v987
  %v1026 = vrcp.pop %v990
  %v1027 = vrcp.pop %v993
  %v1028 = vrcp.pop %v996
  %v1029 = vrcp.pop %v999
  %v1030 = vrcp.pop %v1002
  %v1031 = vrcp.pop %v1005
  %v1032 = vrcp.pop %v1008
  %v1033 = vrcp.pop %v1011
  %v1034 = vrcp.pop %v1014
  %v1035 = vrcp.pop %v1017
  %v1036 = vrcp.pop %v1020
  %v1037 = vmul.f32 %v942, %v1021
  %v1038 = vmul.f32 %v944, %v1022
  %v1039 = vmul.f32 %v946, %v1023
  %v1040 = vmul.f32 %v948, %v1024
  %v1041 = vmul.f32 %v950, %v1025
  %v1042 = vmul.f32 %v952, %v1026
  %v1043 = vmul.f32 %v954, %v1027
  %v1044 = vmul.f32 %v956, %v1028
  %v1045 = vmul.f32 %v958, %v1029
  %v1046 = vmul.f32 %v960, %v1030
  %v1047 = vmul.f32 %v962, %v1031
  %v1048 = vmul.f32 %v964, %v1032
  %v1049 = vmul.f32 %v966, %v1033
  %v1050 = vmul.f32 %v968, %v1034
  %v1051 = vmul.f32 %v970, %v1035
  %v1052 = vmul.f32 %v972, %v1036
  %v1054 = vsel %vm644, %v1037, 0
  %v1057 = vsel %vm644, %v1038, 0
  %v1060 = vsel %vm644, %v370, 0
  %v1063 = vsel %vm644, %v371, 0
  %1065 = vmatpush.xpose.msra.mxu0 0.0
  %1066 = vmatpush.xpose.msra.mxu0 0.0
  %1067 = vmatpush.xpose.msra.mxu0 0.0
  %1068 = vmatpush.xpose.msra.mxu0 0.0
  %1069 = vmatpush.xpose.msra.mxu0 0.0
  %1070 = vmatpush.xpose.msra.mxu0 0.0
  %1071 = vmatpush.xpose.msra.mxu0 0.0
  %1072 = vmatpush.xpose.msra.mxu0 0.0
  %1073 = vmatpush.xpose.msra.mxu0 0.0
  %1074 = vmatpush.xpose.msra.mxu0 0.0
  %1075 = vmatpush.xpose.msra.mxu0 0.0
  %1076 = vmatpush.xpose.msra.mxu0 0.0
  %1077 = vmatpush.xpose.msra.mxu0 0.0
  %1078 = vmatpush.xpose.msra.mxu0 0.0
  %1079 = vmatpush.xpose.msra.mxu0 %v1063
  %1080 = vmatpush.xpose.msra.mxu0 %v1060
  %1081 = vmatmul.f32.gmra.mxu0 %v1054
  %v1082 = vpop.f32.mrf.mxu0
  %v1083 = vadd.f32 0.0, %v1082
  %1084 = vmatmul.f32.gmra.mxu0 %v1057
  %v1085 = vpop.f32.mrf.mxu0
  %v1086 = vadd.f32 0.0, %v1085
  %1087 = vdwg.mxu0
  %v1089 = vsel %vm644, %v1039, 0
  %v1092 = vsel %vm644, %v1040, 0
  %v1095 = vsel %vm644, %v372, 0
  %v1098 = vsel %vm644, %v373, 0
  %1100 = vmatpush.xpose.msra.mxu0 0.0
  %1101 = vmatpush.xpose.msra.mxu0 0.0
  %1102 = vmatpush.xpose.msra.mxu0 0.0
  %1103 = vmatpush.xpose.msra.mxu0 0.0
  %1104 = vmatpush.xpose.msra.mxu0 0.0
  %1105 = vmatpush.xpose.msra.mxu0 0.0
  %1106 = vmatpush.xpose.msra.mxu0 0.0
  %1107 = vmatpush.xpose.msra.mxu0 0.0
  %1108 = vmatpush.xpose.msra.mxu0 0.0
  %1109 = vmatpush.xpose.msra.mxu0 0.0
  %1110 = vmatpush.xpose.msra.mxu0 0.0
  %1111 = vmatpush.xpose.msra.mxu0 0.0
  %1112 = vmatpush.xpose.msra.mxu0 0.0
  %1113 = vmatpush.xpose.msra.mxu0 0.0
  %1114 = vmatpush.xpose.msra.mxu0 %v1098
  %1115 = vmatpush.xpose.msra.mxu0 %v1095
  %1116 = vmatmul.f32.gmra.mxu0 %v1089
  %v1117 = vpop.f32.mrf.mxu0
  %v1118 = vadd.f32 0.0, %v1117
  %1119 = vmatmul.f32.gmra.mxu0 %v1092
  %v1120 = vpop.f32.mrf.mxu0
  %v1121 = vadd.f32 0.0, %v1120
  %1122 = vdwg.mxu0
  %v1124 = vsel %vm644, %v1041, 0
  %v1127 = vsel %vm644, %v1042, 0
  %v1130 = vsel %vm644, %v374, 0
  %v1133 = vsel %vm644, %v375, 0
  %1135 = vmatpush.xpose.msra.mxu0 0.0
  %1136 = vmatpush.xpose.msra.mxu0 0.0
  %1137 = vmatpush.xpose.msra.mxu0 0.0
  %1138 = vmatpush.xpose.msra.mxu0 0.0
  %1139 = vmatpush.xpose.msra.mxu0 0.0
  %1140 = vmatpush.xpose.msra.mxu0 0.0
  %1141 = vmatpush.xpose.msra.mxu0 0.0
  %1142 = vmatpush.xpose.msra.mxu0 0.0
  %1143 = vmatpush.xpose.msra.mxu0 0.0
  %1144 = vmatpush.xpose.msra.mxu0 0.0
  %1145 = vmatpush.xpose.msra.mxu0 0.0
  %1146 = vmatpush.xpose.msra.mxu0 0.0
  %1147 = vmatpush.xpose.msra.mxu0 0.0
  %1148 = vmatpush.xpose.msra.mxu0 0.0
  %1149 = vmatpush.xpose.msra.mxu0 %v1133
  %1150 = vmatpush.xpose.msra.mxu0 %v1130
  %1151 = vmatmul.f32.gmra.mxu0 %v1124
  %v1152 = vpop.f32.mrf.mxu0
  %v1153 = vadd.f32 0.0, %v1152
  %1154 = vmatmul.f32.gmra.mxu0 %v1127
  %v1155 = vpop.f32.mrf.mxu0
  %v1156 = vadd.f32 0.0, %v1155
  %1157 = vdwg.mxu0
  %v1159 = vsel %vm644, %v1043, 0
  %v1162 = vsel %vm644, %v1044, 0
  %v1165 = vsel %vm644, %v376, 0
  %v1168 = vsel %vm644, %v377, 0
  %1170 = vmatpush.xpose.msra.mxu0 0.0
  %1171 = vmatpush.xpose.msra.mxu0 0.0
  %1172 = vmatpush.xpose.msra.mxu0 0.0
  %1173 = vmatpush.xpose.msra.mxu0 0.0
  %1174 = vmatpush.xpose.msra.mxu0 0.0
  %1175 = vmatpush.xpose.msra.mxu0 0.0
  %1176 = vmatpush.xpose.msra.mxu0 0.0
  %1177 = vmatpush.xpose.msra.mxu0 0.0
  %1178 = vmatpush.xpose.msra.mxu0 0.0
  %1179 = vmatpush.xpose.msra.mxu0 0.0
  %1180 = vmatpush.xpose.msra.mxu0 0.0
  %1181 = vmatpush.xpose.msra.mxu0 0.0
  %1182 = vmatpush.xpose.msra.mxu0 0.0
  %1183 = vmatpush.xpose.msra.mxu0 0.0
  %1184 = vmatpush.xpose.msra.mxu0 %v1168
  %1185 = vmatpush.xpose.msra.mxu0 %v1165
  %1186 = vmatmul.f32.gmra.mxu0 %v1159
  %v1187 = vpop.f32.mrf.mxu0
  %v1188 = vadd.f32 0.0, %v1187
  %1189 = vmatmul.f32.gmra.mxu0 %v1162
  %v1190 = vpop.f32.mrf.mxu0
  %v1191 = vadd.f32 0.0, %v1190
  %1192 = vdwg.mxu0
  %v1194 = vsel %vm644, %v1045, 0
  %v1197 = vsel %vm644, %v1046, 0
  %v1200 = vsel %vm644, %v378, 0
  %v1203 = vsel %vm644, %v379, 0
  %1205 = vmatpush.xpose.msra.mxu0 0.0
  %1206 = vmatpush.xpose.msra.mxu0 0.0
  %1207 = vmatpush.xpose.msra.mxu0 0.0
  %1208 = vmatpush.xpose.msra.mxu0 0.0
  %1209 = vmatpush.xpose.msra.mxu0 0.0
  %1210 = vmatpush.xpose.msra.mxu0 0.0
  %1211 = vmatpush.xpose.msra.mxu0 0.0
  %1212 = vmatpush.xpose.msra.mxu0 0.0
  %1213 = vmatpush.xpose.msra.mxu0 0.0
  %1214 = vmatpush.xpose.msra.mxu0 0.0
  %1215 = vmatpush.xpose.msra.mxu0 0.0
  %1216 = vmatpush.xpose.msra.mxu0 0.0
  %1217 = vmatpush.xpose.msra.mxu0 0.0
  %1218 = vmatpush.xpose.msra.mxu0 0.0
  %1219 = vmatpush.xpose.msra.mxu0 %v1203
  %1220 = vmatpush.xpose.msra.mxu0 %v1200
  %1221 = vmatmul.f32.gmra.mxu0 %v1194
  %v1222 = vpop.f32.mrf.mxu0
  %v1223 = vadd.f32 0.0, %v1222
  %1224 = vmatmul.f32.gmra.mxu0 %v1197
  %v1225 = vpop.f32.mrf.mxu0
  %v1226 = vadd.f32 0.0, %v1225
  %1227 = vdwg.mxu0
  %v1229 = vsel %vm644, %v1047, 0
  %v1232 = vsel %vm644, %v1048, 0
  %v1235 = vsel %vm644, %v380, 0
  %v1238 = vsel %vm644, %v381, 0
  %1240 = vmatpush.xpose.msra.mxu0 0.0
  %1241 = vmatpush.xpose.msra.mxu0 0.0
  %1242 = vmatpush.xpose.msra.mxu0 0.0
  %1243 = vmatpush.xpose.msra.mxu0 0.0
  %1244 = vmatpush.xpose.msra.mxu0 0.0
  %1245 = vmatpush.xpose.msra.mxu0 0.0
  %1246 = vmatpush.xpose.msra.mxu0 0.0
  %1247 = vmatpush.xpose.msra.mxu0 0.0
  %1248 = vmatpush.xpose.msra.mxu0 0.0
  %1249 = vmatpush.xpose.msra.mxu0 0.0
  %1250 = vmatpush.xpose.msra.mxu0 0.0
  %1251 = vmatpush.xpose.msra.mxu0 0.0
  %1252 = vmatpush.xpose.msra.mxu0 0.0
  %1253 = vmatpush.xpose.msra.mxu0 0.0
  %1254 = vmatpush.xpose.msra.mxu0 %v1238
  %1255 = vmatpush.xpose.msra.mxu0 %v1235
  %1256 = vmatmul.f32.gmra.mxu0 %v1229
  %v1257 = vpop.f32.mrf.mxu0
  %v1258 = vadd.f32 0.0, %v1257
  %1259 = vmatmul.f32.gmra.mxu0 %v1232
  %v1260 = vpop.f32.mrf.mxu0
  %v1261 = vadd.f32 0.0, %v1260
  %1262 = vdwg.mxu0
  %v1264 = vsel %vm644, %v1049, 0
  %v1267 = vsel %vm644, %v1050, 0
  %v1270 = vsel %vm644, %v382, 0
  %v1273 = vsel %vm644, %v383, 0
  %1275 = vmatpush.xpose.msra.mxu0 0.0
  %1276 = vmatpush.xpose.msra.mxu0 0.0
  %1277 = vmatpush.xpose.msra.mxu0 0.0
  %1278 = vmatpush.xpose.msra.mxu0 0.0
  %1279 = vmatpush.xpose.msra.mxu0 0.0
  %1280 = vmatpush.xpose.msra.mxu0 0.0
  %1281 = vmatpush.xpose.msra.mxu0 0.0
  %1282 = vmatpush.xpose.msra.mxu0 0.0
  %1283 = vmatpush.xpose.msra.mxu0 0.0
  %1284 = vmatpush.xpose.msra.mxu0 0.0
  %1285 = vmatpush.xpose.msra.mxu0 0.0
  %1286 = vmatpush.xpose.msra.mxu0 0.0
  %1287 = vmatpush.xpose.msra.mxu0 0.0
  %1288 = vmatpush.xpose.msra.mxu0 0.0
  %1289 = vmatpush.xpose.msra.mxu0 %v1273
  %1290 = vmatpush.xpose.msra.mxu0 %v1270
  %1291 = vmatmul.f32.gmra.mxu0 %v1264
  %v1292 = vpop.f32.mrf.mxu0
  %v1293 = vadd.f32 0.0, %v1292
  %1294 = vmatmul.f32.gmra.mxu0 %v1267
  %v1295 = vpop.f32.mrf.mxu0
  %v1296 = vadd.f32 0.0, %v1295
  %1297 = vdwg.mxu0
  %v1299 = vsel %vm644, %v1051, 0
  %v1302 = vsel %vm644, %v1052, 0
  %v1305 = vsel %vm644, %v384, 0
  %v1308 = vsel %vm644, %v385, 0
  %1310 = vmatpush.xpose.msra.mxu0 0.0
  %1311 = vmatpush.xpose.msra.mxu0 0.0
  %1312 = vmatpush.xpose.msra.mxu0 0.0
  %1313 = vmatpush.xpose.msra.mxu0 0.0
  %1314 = vmatpush.xpose.msra.mxu0 0.0
  %1315 = vmatpush.xpose.msra.mxu0 0.0
  %1316 = vmatpush.xpose.msra.mxu0 0.0
  %1317 = vmatpush.xpose.msra.mxu0 0.0
  %1318 = vmatpush.xpose.msra.mxu0 0.0
  %1319 = vmatpush.xpose.msra.mxu0 0.0
  %1320 = vmatpush.xpose.msra.mxu0 0.0
  %1321 = vmatpush.xpose.msra.mxu0 0.0
  %1322 = vmatpush.xpose.msra.mxu0 0.0
  %1323 = vmatpush.xpose.msra.mxu0 0.0
  %1324 = vmatpush.xpose.msra.mxu0 %v1308
  %1325 = vmatpush.xpose.msra.mxu0 %v1305
  %1326 = vmatmul.f32.gmra.mxu0 %v1299
  %v1327 = vpop.f32.mrf.mxu0
  %v1328 = vadd.f32 0.0, %v1327
  %1329 = vmatmul.f32.gmra.mxu0 %v1302
  %v1330 = vpop.f32.mrf.mxu0
  %v1331 = vadd.f32 0.0, %v1330
  %1332 = vdwg.mxu0
  %v1333 = vpack.c.bf16 %v1083, %v1083
  %v1334 = vpack.c.bf16 %v1086, %v1086
  %v1335 = vpack.c.bf16 %v1118, %v1118
  %v1336 = vpack.c.bf16 %v1121, %v1121
  %v1337 = vpack.c.bf16 %v1153, %v1153
  %v1338 = vpack.c.bf16 %v1156, %v1156
  %v1339 = vpack.c.bf16 %v1188, %v1188
  %v1340 = vpack.c.bf16 %v1191, %v1191
  %v1341 = vpack.c.bf16 %v1223, %v1223
  %v1342 = vpack.c.bf16 %v1226, %v1226
  %v1343 = vpack.c.bf16 %v1258, %v1258
  %v1344 = vpack.c.bf16 %v1261, %v1261
  %v1345 = vpack.c.bf16 %v1293, %v1293
  %v1346 = vpack.c.bf16 %v1296, %v1296
  %v1347 = vpack.c.bf16 %v1328, %v1328
  %v1348 = vpack.c.bf16 %v1331, %v1331
  %v1349 = vld [vmem:[%s8] sm:$0xf]
  %v1350 = vld [vmem:[%s8 + $0x4] sm:$0xf]
  %v1351 = vld [vmem:[%s8 + $0x8] sm:$0xf]
  %v1352 = vld [vmem:[%s8 + $0xc] sm:$0xf]
  %v1353 = vld [vmem:[%s8 + $0x10] sm:$0xf]
  %v1354 = vld [vmem:[%s8 + $0x14] sm:$0xf]
  %v1355 = vld [vmem:[%s8 + $0x18] sm:$0xf]
  %v1356 = vld [vmem:[%s8 + $0x1c] sm:$0xf]
  %v1357 = vld [vmem:[%s8 + $0x20] sm:$0xf]
  %v1358 = vld [vmem:[%s8 + $0x24] sm:$0xf]
  %v1359 = vld [vmem:[%s8 + $0x28] sm:$0xf]
  %v1360 = vld [vmem:[%s8 + $0x2c] sm:$0xf]
  %v1361 = vld [vmem:[%s8 + $0x30] sm:$0xf]
  %v1362 = vld [vmem:[%s8 + $0x34] sm:$0xf]
  %v1363 = vld [vmem:[%s8 + $0x38] sm:$0xf]
  %v1364 = vld [vmem:[%s8 + $0x3c] sm:$0xf]
  %v1367 = vunpack.c.l.b16 %v1333
  %v1368 = vunpack.c.l.b16 %v1334
  %v1369 = vpack.c.b16 %v1368, %v1367
  %v1372 = vunpack.c.l.b16 %v1349
  %v1373 = vunpack.c.l.b16 %v1350
  %v1374 = vpack.c.b16 %v1373, %v1372
  %v1377 = vsel %vm644, %v1369, 0
  %1379 = vmatpush.bf16.msra.mxu0 0
  %1380 = vmatpush.bf16.msra.mxu0 0
  %1381 = vmatpush.bf16.msra.mxu0 0
  %1382 = vmatpush.bf16.msra.mxu0 0
  %1383 = vmatpush.bf16.msra.mxu0 0
  %1384 = vmatpush.bf16.msra.mxu0 0
  %1385 = vmatpush.bf16.msra.mxu0 0
  %1386 = vmatpush.bf16.msra.mxu0 %v1374
  %1387 = vmatmul.bf16.gmra.mxu0 %v1377
  %v1388 = vpop.f32.mrf.mxu0
  %v1389 = vadd.f32 0.0, %v1388
  %v1390 = vpop.f32.mrf.mxu0
  %v1391 = vadd.f32 0.0, %v1390
  %1392 = vdwg.mxu0
  %v1395 = vunpack.c.l.b16 %v1335
  %v1396 = vunpack.c.l.b16 %v1336
  %v1397 = vpack.c.b16 %v1396, %v1395
  %v1400 = vunpack.c.l.b16 %v1351
  %v1401 = vunpack.c.l.b16 %v1352
  %v1402 = vpack.c.b16 %v1401, %v1400
  %v1405 = vsel %vm644, %v1397, 0
  %1407 = vmatpush.bf16.msra.mxu0 0
  %1408 = vmatpush.bf16.msra.mxu0 0
  %1409 = vmatpush.bf16.msra.mxu0 0
  %1410 = vmatpush.bf16.msra.mxu0 0
  %1411 = vmatpush.bf16.msra.mxu0 0
  %1412 = vmatpush.bf16.msra.mxu0 0
  %1413 = vmatpush.bf16.msra.mxu0 0
  %1414 = vmatpush.bf16.msra.mxu0 %v1402
  %1415 = vmatmul.bf16.gmra.mxu0 %v1405
  %v1416 = vpop.f32.mrf.mxu0
  %v1417 = vadd.f32 0.0, %v1416
  %v1418 = vpop.f32.mrf.mxu0
  %v1419 = vadd.f32 0.0, %v1418
  %1420 = vdwg.mxu0
  %v1423 = vunpack.c.l.b16 %v1337
  %v1424 = vunpack.c.l.b16 %v1338
  %v1425 = vpack.c.b16 %v1424, %v1423
  %v1428 = vunpack.c.l.b16 %v1353
  %v1429 = vunpack.c.l.b16 %v1354
  %v1430 = vpack.c.b16 %v1429, %v1428
  %v1433 = vsel %vm644, %v1425, 0
  %1435 = vmatpush.bf16.msra.mxu0 0
  %1436 = vmatpush.bf16.msra.mxu0 0
  %1437 = vmatpush.bf16.msra.mxu0 0
  %1438 = vmatpush.bf16.msra.mxu0 0
  %1439 = vmatpush.bf16.msra.mxu0 0
  %1440 = vmatpush.bf16.msra.mxu0 0
  %1441 = vmatpush.bf16.msra.mxu0 0
  %1442 = vmatpush.bf16.msra.mxu0 %v1430
  %1443 = vmatmul.bf16.gmra.mxu0 %v1433
  %v1444 = vpop.f32.mrf.mxu0
  %v1445 = vadd.f32 0.0, %v1444
  %v1446 = vpop.f32.mrf.mxu0
  %v1447 = vadd.f32 0.0, %v1446
  %1448 = vdwg.mxu0
  %v1451 = vunpack.c.l.b16 %v1339
  %v1452 = vunpack.c.l.b16 %v1340
  %v1453 = vpack.c.b16 %v1452, %v1451
  %v1456 = vunpack.c.l.b16 %v1355
  %v1457 = vunpack.c.l.b16 %v1356
  %v1458 = vpack.c.b16 %v1457, %v1456
  %v1461 = vsel %vm644, %v1453, 0
  %1463 = vmatpush.bf16.msra.mxu0 0
  %1464 = vmatpush.bf16.msra.mxu0 0
  %1465 = vmatpush.bf16.msra.mxu0 0
  %1466 = vmatpush.bf16.msra.mxu0 0
  %1467 = vmatpush.bf16.msra.mxu0 0
  %1468 = vmatpush.bf16.msra.mxu0 0
  %1469 = vmatpush.bf16.msra.mxu0 0
  %1470 = vmatpush.bf16.msra.mxu0 %v1458
  %1471 = vmatmul.bf16.gmra.mxu0 %v1461
  %v1472 = vpop.f32.mrf.mxu0
  %v1473 = vadd.f32 0.0, %v1472
  %v1474 = vpop.f32.mrf.mxu0
  %v1475 = vadd.f32 0.0, %v1474
  %1476 = vdwg.mxu0
  %v1479 = vunpack.c.l.b16 %v1341
  %v1480 = vunpack.c.l.b16 %v1342
  %v1481 = vpack.c.b16 %v1480, %v1479
  %v1484 = vunpack.c.l.b16 %v1357
  %v1485 = vunpack.c.l.b16 %v1358
  %v1486 = vpack.c.b16 %v1485, %v1484
  %v1489 = vsel %vm644, %v1481, 0
  %1491 = vmatpush.bf16.msra.mxu0 0
  %1492 = vmatpush.bf16.msra.mxu0 0
  %1493 = vmatpush.bf16.msra.mxu0 0
  %1494 = vmatpush.bf16.msra.mxu0 0
  %1495 = vmatpush.bf16.msra.mxu0 0
  %1496 = vmatpush.bf16.msra.mxu0 0
  %1497 = vmatpush.bf16.msra.mxu0 0
  %1498 = vmatpush.bf16.msra.mxu0 %v1486
  %1499 = vmatmul.bf16.gmra.mxu0 %v1489
  %v1500 = vpop.f32.mrf.mxu0
  %v1501 = vadd.f32 0.0, %v1500
  %v1502 = vpop.f32.mrf.mxu0
  %v1503 = vadd.f32 0.0, %v1502
  %1504 = vdwg.mxu0
  %v1507 = vunpack.c.l.b16 %v1343
  %v1508 = vunpack.c.l.b16 %v1344
  %v1509 = vpack.c.b16 %v1508, %v1507
  %v1512 = vunpack.c.l.b16 %v1359
  %v1513 = vunpack.c.l.b16 %v1360
  %v1514 = vpack.c.b16 %v1513, %v1512
  %v1517 = vsel %vm644, %v1509, 0
  %1519 = vmatpush.bf16.msra.mxu0 0
  %1520 = vmatpush.bf16.msra.mxu0 0
  %1521 = vmatpush.bf16.msra.mxu0 0
  %1522 = vmatpush.bf16.msra.mxu0 0
  %1523 = vmatpush.bf16.msra.mxu0 0
  %1524 = vmatpush.bf16.msra.mxu0 0
  %1525 = vmatpush.bf16.msra.mxu0 0
  %1526 = vmatpush.bf16.msra.mxu0 %v1514
  %1527 = vmatmul.bf16.gmra.mxu0 %v1517
  %v1528 = vpop.f32.mrf.mxu0
  %v1529 = vadd.f32 0.0, %v1528
  %v1530 = vpop.f32.mrf.mxu0
  %v1531 = vadd.f32 0.0, %v1530
  %1532 = vdwg.mxu0
  %v1535 = vunpack.c.l.b16 %v1345
  %v1536 = vunpack.c.l.b16 %v1346
  %v1537 = vpack.c.b16 %v1536, %v1535
  %v1540 = vunpack.c.l.b16 %v1361
  %v1541 = vunpack.c.l.b16 %v1362
  %v1542 = vpack.c.b16 %v1541, %v1540
  %v1545 = vsel %vm644, %v1537, 0
  %1547 = vmatpush.bf16.msra.mxu0 0
  %1548 = vmatpush.bf16.msra.mxu0 0
  %1549 = vmatpush.bf16.msra.mxu0 0
  %1550 = vmatpush.bf16.msra.mxu0 0
  %1551 = vmatpush.bf16.msra.mxu0 0
  %1552 = vmatpush.bf16.msra.mxu0 0
  %1553 = vmatpush.bf16.msra.mxu0 0
  %1554 = vmatpush.bf16.msra.mxu0 %v1542
  %1555 = vmatmul.bf16.gmra.mxu0 %v1545
  %v1556 = vpop.f32.mrf.mxu0
  %v1557 = vadd.f32 0.0, %v1556
  %v1558 = vpop.f32.mrf.mxu0
  %v1559 = vadd.f32 0.0, %v1558
  %1560 = vdwg.mxu0
  %v1563 = vunpack.c.l.b16 %v1347
  %v1564 = vunpack.c.l.b16 %v1348
  %v1565 = vpack.c.b16 %v1564, %v1563
  %v1568 = vunpack.c.l.b16 %v1363
  %v1569 = vunpack.c.l.b16 %v1364
  %v1570 = vpack.c.b16 %v1569, %v1568
  %v1573 = vsel %vm644, %v1565, 0
  %1575 = vmatpush.bf16.msra.mxu0 0
  %1576 = vmatpush.bf16.msra.mxu0 0
  %1577 = vmatpush.bf16.msra.mxu0 0
  %1578 = vmatpush.bf16.msra.mxu0 0
  %1579 = vmatpush.bf16.msra.mxu0 0
  %1580 = vmatpush.bf16.msra.mxu0 0
  %1581 = vmatpush.bf16.msra.mxu0 0
  %1582 = vmatpush.bf16.msra.mxu0 %v1570
  %1583 = vmatmul.bf16.gmra.mxu0 %v1573
  %v1584 = vpop.f32.mrf.mxu0
  %v1585 = vadd.f32 0.0, %v1584
  %v1586 = vpop.f32.mrf.mxu0
  %v1587 = vadd.f32 0.0, %v1586
  %1588 = vdwg.mxu0
  %v1589 = vadd.f32 %v1389, %v1417
  %v1590 = vadd.f32 %v1589, %v1445
  %v1591 = vadd.f32 %v1590, %v1473
  %v1592 = vadd.f32 %v1591, %v1501
  %v1593 = vadd.f32 %v1592, %v1529
  %v1594 = vadd.f32 %v1593, %v1557
  %v1595 = vadd.f32 %v1594, %v1585
  %v1596 = vadd.f32 %v1391, %v1419
  %v1597 = vadd.f32 %v1596, %v1447
  %v1598 = vadd.f32 %v1597, %v1475
  %v1599 = vadd.f32 %v1598, %v1503
  %v1600 = vadd.f32 %v1599, %v1531
  %v1601 = vadd.f32 %v1600, %v1559
  %v1602 = vadd.f32 %v1601, %v1587
  %v1603 = vld [vmem:[%s9] sm:$0x1]
  %v1605 = vperm.slane %v1603, 0
  %v1607 = vadd.f32 %v1595, %v1605
  %v1608 = vadd.f32 %v1602, %v1605
  %v1609 = vadd.f32 %v60, %v1607
  %v1610 = vadd.f32 %v61, %v1608
  %v1611 = vld [vmem:[%s10] sm:$0x1]
  %v1612 = vld [vmem:[%s11] sm:$0x1]
  %1613 = vadd.xlane.f32.xlu0 %v1609
  %v1614 = vpop.xlane.xlu0 %1613
  %1615 = vadd.xlane.f32.xlu0 %v1610
  %v1616 = vpop.xlane.xlu0 %1615
  %v1617 = vrcp.pop 128.0
  %v1618 = vmul.f32 128.0, %v1617
  %v1619 = vsub.f32 1.0, %v1618
  %v1620 = vmul.f32 %v1617, %v1619
  %v1621 = vadd.f32 %v1617, %v1620
  %vm1622 = vweird.f32 %v1617
  %v1623 = vsel %vm1622, %v1617, %v1621
  %v1624 = vmul.f32 %v1614, %v1623
  %v1625 = vmul.f32 %v1616, %v1623
  %v1626 = vsub.f32 %v1609, %v1624
  %v1627 = vsub.f32 %v1610, %v1625
  %v1628 = vmul.f32 %v1626, %v1626
  %v1629 = vmul.f32 %v1627, %v1627
  %1630 = vadd.xlane.f32.xlu0 %v1628
  %v1631 = vpop.xlane.xlu0 %1630
  %1632 = vadd.xlane.f32.xlu0 %v1629
  %v1633 = vpop.xlane.xlu0 %1632
  %v1634 = vmul.f32 %v1631, %v1623
  %v1635 = vmul.f32 %v1633, %v1623
  %v1636 = vadd.f32 %v1634, 1e-05
  %v1637 = vadd.f32 %v1635, 1e-05
  %v1638 = vrsqrt.pop %v1636
  %v1639 = vmul.f32 %v1638, %v1636
  %v1640 = vmul.f32 %v1639, %v1638
  %v1641 = vmul.f32 0.5, %v1640
  %v1642 = vsub.f32 1.5, %v1641
  %v1643 = vmul.f32 %v1638, %v1642
  %vm1644 = vweird.f32 %v1636
  %vm1645 = vweird.f32 %v1638
  %vm1646 = vmor %vm1644, %vm1645
  %v1647 = vsel %vm1646, %v1638, %v1643
  %v1648 = vrsqrt.pop %v1637
  %v1649 = vmul.f32 %v1648, %v1637
  %v1650 = vmul.f32 %v1649, %v1648
  %v1651 = vmul.f32 0.5, %v1650
  %v1652 = vsub.f32 1.5, %v1651
  %v1653 = vmul.f32 %v1648, %v1652
  %vm1654 = vweird.f32 %v1637
  %vm1655 = vweird.f32 %v1648
  %vm1656 = vmor %vm1654, %vm1655
  %v1657 = vsel %vm1656, %v1648, %v1653
  %v1658 = vmul.f32 %v1626, %v1647
  %v1659 = vmul.f32 %v1627, %v1657
  %v1661 = vperm.slane %v1611, 0
  %v1663 = vmul.f32 %v1658, %v1661
  %v1664 = vmul.f32 %v1659, %v1661
  %v1666 = vperm.slane %v1612, 0
  %v1668 = vadd.f32 %v1663, %v1666
  %v1669 = vadd.f32 %v1664, %v1666
  %v1670 = vpack.c.bf16 %v1669, %v1668
  %v1671 = vld [vmem:[%s12] sm:$0xff]
  %v1672 = vld [vmem:[%s12 + $0x8] sm:$0xff]
  %v1673 = vld [vmem:[%s12 + $0x10] sm:$0xff]
  %v1674 = vld [vmem:[%s12 + $0x18] sm:$0xff]
  %v1675 = vld [vmem:[%s12 + $0x20] sm:$0xff]
  %v1676 = vld [vmem:[%s12 + $0x28] sm:$0xff]
  %v1677 = vld [vmem:[%s12 + $0x30] sm:$0xff]
  %v1678 = vld [vmem:[%s12 + $0x38] sm:$0xff]
  %v1679 = vld [vmem:[%s12 + $0x40] sm:$0xff]
  %v1680 = vld [vmem:[%s12 + $0x48] sm:$0xff]
  %v1681 = vld [vmem:[%s12 + $0x50] sm:$0xff]
  %v1682 = vld [vmem:[%s12 + $0x58] sm:$0xff]
  %v1683 = vld [vmem:[%s12 + $0x60] sm:$0xff]
  %v1684 = vld [vmem:[%s12 + $0x68] sm:$0xff]
  %v1685 = vld [vmem:[%s12 + $0x70] sm:$0xff]
  %v1686 = vld [vmem:[%s12 + $0x78] sm:$0xff]
  %v1687 = vld [vmem:[%s13] sm:$0x3]
  %v1689 = vperm.slane %v1687, 0
  %v1690 = vperm.slane %v1687, 1
  %v1709 = vunpack.c.l.b16 %v1671
  %v1710 = vunpack.c.h.b16 %v1671
  %v1711 = vunpack.c.l.b16 %v1672
  %v1712 = vunpack.c.h.b16 %v1672
  %v1713 = vunpack.c.l.b16 %v1673
  %v1714 = vunpack.c.h.b16 %v1673
  %v1715 = vunpack.c.l.b16 %v1674
  %v1716 = vunpack.c.h.b16 %v1674
  %v1717 = vunpack.c.l.b16 %v1675
  %v1718 = vunpack.c.h.b16 %v1675
  %v1719 = vunpack.c.l.b16 %v1676
  %v1720 = vunpack.c.h.b16 %v1676
  %v1721 = vunpack.c.l.b16 %v1677
  %v1722 = vunpack.c.h.b16 %v1677
  %v1723 = vunpack.c.l.b16 %v1678
  %v1724 = vunpack.c.h.b16 %v1678
  %v1725 = vunpack.c.l.b16 %v1679
  %v1726 = vunpack.c.h.b16 %v1679
  %v1727 = vunpack.c.l.b16 %v1680
  %v1728 = vunpack.c.h.b16 %v1680
  %v1729 = vunpack.c.l.b16 %v1681
  %v1730 = vunpack.c.h.b16 %v1681
  %v1731 = vunpack.c.l.b16 %v1682
  %v1732 = vunpack.c.h.b16 %v1682
  %v1733 = vunpack.c.l.b16 %v1683
  %v1734 = vunpack.c.h.b16 %v1683
  %v1735 = vunpack.c.l.b16 %v1684
  %v1736 = vunpack.c.h.b16 %v1684
  %v1737 = vunpack.c.l.b16 %v1685
  %v1738 = vunpack.c.h.b16 %v1685
  %v1739 = vunpack.c.l.b16 %v1686
  %v1740 = vunpack.c.h.b16 %v1686
  %v1741 = vpack.c.b16 %v1711, %v1709
  %v1742 = vpack.c.b16 %v1712, %v1710
  %v1743 = vpack.c.b16 %v1715, %v1713
  %v1744 = vpack.c.b16 %v1716, %v1714
  %v1745 = vpack.c.b16 %v1719, %v1717
  %v1746 = vpack.c.b16 %v1720, %v1718
  %v1747 = vpack.c.b16 %v1723, %v1721
  %v1748 = vpack.c.b16 %v1724, %v1722
  %v1749 = vpack.c.b16 %v1727, %v1725
  %v1750 = vpack.c.b16 %v1728, %v1726
  %v1751 = vpack.c.b16 %v1731, %v1729
  %v1752 = vpack.c.b16 %v1732, %v1730
  %v1753 = vpack.c.b16 %v1735, %v1733
  %v1754 = vpack.c.b16 %v1736, %v1734
  %v1755 = vpack.c.b16 %v1739, %v1737
  %v1756 = vpack.c.b16 %v1740, %v1738
  %1773 = vmatpush.bf16.msra.mxu0 %v1755
  %1774 = vmatpush.bf16.msra.mxu0 %v1753
  %1775 = vmatpush.bf16.msra.mxu0 %v1751
  %1776 = vmatpush.bf16.msra.mxu0 %v1749
  %1777 = vmatpush.bf16.msra.mxu0 %v1747
  %1778 = vmatpush.bf16.msra.mxu0 %v1745
  %1779 = vmatpush.bf16.msra.mxu0 %v1743
  %1780 = vmatpush.bf16.msra.mxu0 %v1741
  %1781 = vmatmul.bf16.gmra.mxu0 %v1670
  %v1782 = vpop.f32.mrf.mxu0
  %v1783 = vadd.f32 %v1689, %v1782
  %v1784 = vpop.f32.mrf.mxu0
  %v1785 = vadd.f32 %v1689, %v1784
  %1786 = vdwg.mxu0
  %1787 = vmatpush.bf16.msra.mxu0 %v1756
  %1788 = vmatpush.bf16.msra.mxu0 %v1754
  %1789 = vmatpush.bf16.msra.mxu0 %v1752
  %1790 = vmatpush.bf16.msra.mxu0 %v1750
  %1791 = vmatpush.bf16.msra.mxu0 %v1748
  %1792 = vmatpush.bf16.msra.mxu0 %v1746
  %1793 = vmatpush.bf16.msra.mxu0 %v1744
  %1794 = vmatpush.bf16.msra.mxu0 %v1742
  %1795 = vmatmul.bf16.gmra.mxu0 %v1670
  %v1796 = vpop.f32.mrf.mxu0
  %v1797 = vadd.f32 %v1690, %v1796
  %v1798 = vpop.f32.mrf.mxu0
  %v1799 = vadd.f32 %v1690, %v1798
  %1800 = vdwg.mxu0
  %v1801 = vmax.f32 %v1783, 0.0
  %v1802 = vmax.f32 %v1797, 0.0
  %v1803 = vmax.f32 %v1785, 0.0
  %v1804 = vmax.f32 %v1799, 0.0
  %v1805 = vpack.c.bf16 %v1803, %v1801
  %v1806 = vpack.c.bf16 %v1804, %v1802
  %v1807 = vld [vmem:[%s14] sm:$0xf]
  %v1808 = vld [vmem:[%s14 + $0x4] sm:$0xf]
  %v1809 = vld [vmem:[%s14 + $0x8] sm:$0xf]
  %v1810 = vld [vmem:[%s14 + $0xc] sm:$0xf]
  %v1811 = vld [vmem:[%s14 + $0x10] sm:$0xf]
  %v1812 = vld [vmem:[%s14 + $0x14] sm:$0xf]
  %v1813 = vld [vmem:[%s14 + $0x18] sm:$0xf]
  %v1814 = vld [vmem:[%s14 + $0x1c] sm:$0xf]
  %v1815 = vld [vmem:[%s14 + $0x20] sm:$0xf]
  %v1816 = vld [vmem:[%s14 + $0x24] sm:$0xf]
  %v1817 = vld [vmem:[%s14 + $0x28] sm:$0xf]
  %v1818 = vld [vmem:[%s14 + $0x2c] sm:$0xf]
  %v1819 = vld [vmem:[%s14 + $0x30] sm:$0xf]
  %v1820 = vld [vmem:[%s14 + $0x34] sm:$0xf]
  %v1821 = vld [vmem:[%s14 + $0x38] sm:$0xf]
  %v1822 = vld [vmem:[%s14 + $0x3c] sm:$0xf]
  %v1823 = vld [vmem:[%s14 + $0x40] sm:$0xf]
  %v1824 = vld [vmem:[%s14 + $0x44] sm:$0xf]
  %v1825 = vld [vmem:[%s14 + $0x48] sm:$0xf]
  %v1826 = vld [vmem:[%s14 + $0x4c] sm:$0xf]
  %v1827 = vld [vmem:[%s14 + $0x50] sm:$0xf]
  %v1828 = vld [vmem:[%s14 + $0x54] sm:$0xf]
  %v1829 = vld [vmem:[%s14 + $0x58] sm:$0xf]
  %v1830 = vld [vmem:[%s14 + $0x5c] sm:$0xf]
  %v1831 = vld [vmem:[%s14 + $0x60] sm:$0xf]
  %v1832 = vld [vmem:[%s14 + $0x64] sm:$0xf]
  %v1833 = vld [vmem:[%s14 + $0x68] sm:$0xf]
  %v1834 = vld [vmem:[%s14 + $0x6c] sm:$0xf]
  %v1835 = vld [vmem:[%s14 + $0x70] sm:$0xf]
  %v1836 = vld [vmem:[%s14 + $0x74] sm:$0xf]
  %v1837 = vld [vmem:[%s14 + $0x78] sm:$0xf]
  %v1838 = vld [vmem:[%s14 + $0x7c] sm:$0xf]
  %v1839 = vld [vmem:[%s15] sm:$0x1]
  %v1841 = vperm.slane %v1839, 0
  %v1875 = vunpack.c.l.b16 %v1807
  %v1876 = vunpack.c.l.b16 %v1808
  %v1877 = vunpack.c.l.b16 %v1809
  %v1878 = vunpack.c.l.b16 %v1810
  %v1879 = vunpack.c.l.b16 %v1811
  %v1880 = vunpack.c.l.b16 %v1812
  %v1881 = vunpack.c.l.b16 %v1813
  %v1882 = vunpack.c.l.b16 %v1814
  %v1883 = vunpack.c.l.b16 %v1815
  %v1884 = vunpack.c.l.b16 %v1816
  %v1885 = vunpack.c.l.b16 %v1817
  %v1886 = vunpack.c.l.b16 %v1818
  %v1887 = vunpack.c.l.b16 %v1819
  %v1888 = vunpack.c.l.b16 %v1820
  %v1889 = vunpack.c.l.b16 %v1821
  %v1890 = vunpack.c.l.b16 %v1822
  %v1891 = vunpack.c.l.b16 %v1823
  %v1892 = vunpack.c.l.b16 %v1824
  %v1893 = vunpack.c.l.b16 %v1825
  %v1894 = vunpack.c.l.b16 %v1826
  %v1895 = vunpack.c.l.b16 %v1827
  %v1896 = vunpack.c.l.b16 %v1828
  %v1897 = vunpack.c.l.b16 %v1829
  %v1898 = vunpack.c.l.b16 %v1830
  %v1899 = vunpack.c.l.b16 %v1831
  %v1900 = vunpack.c.l.b16 %v1832
  %v1901 = vunpack.c.l.b16 %v1833
  %v1902 = vunpack.c.l.b16 %v1834
  %v1903 = vunpack.c.l.b16 %v1835
  %v1904 = vunpack.c.l.b16 %v1836
  %v1905 = vunpack.c.l.b16 %v1837
  %v1906 = vunpack.c.l.b16 %v1838
  %v1907 = vpack.c.b16 %v1876, %v1875
  %v1908 = vpack.c.b16 %v1878, %v1877
  %v1909 = vpack.c.b16 %v1880, %v1879
  %v1910 = vpack.c.b16 %v1882, %v1881
  %v1911 = vpack.c.b16 %v1884, %v1883
  %v1912 = vpack.c.b16 %v1886, %v1885
  %v1913 = vpack.c.b16 %v1888, %v1887
  %v1914 = vpack.c.b16 %v1890, %v1889
  %v1915 = vpack.c.b16 %v1892, %v1891
  %v1916 = vpack.c.b16 %v1894, %v1893
  %v1917 = vpack.c.b16 %v1896, %v1895
  %v1918 = vpack.c.b16 %v1898, %v1897
  %v1919 = vpack.c.b16 %v1900, %v1899
  %v1920 = vpack.c.b16 %v1902, %v1901
  %v1921 = vpack.c.b16 %v1904, %v1903
  %v1922 = vpack.c.b16 %v1906, %v1905
  %1939 = vmatpush.bf16.msra.mxu0 %v1914
  %1940 = vmatpush.bf16.msra.mxu0 %v1913
  %1941 = vmatpush.bf16.msra.mxu0 %v1912
  %1942 = vmatpush.bf16.msra.mxu0 %v1911
  %1943 = vmatpush.bf16.msra.mxu0 %v1910
  %1944 = vmatpush.bf16.msra.mxu0 %v1909
  %1945 = vmatpush.bf16.msra.mxu0 %v1908
  %1946 = vmatpush.bf16.msra.mxu0 %v1907
  %1947 = vmatmul.bf16.gmra.mxu0 %v1805
  %v1948 = vpop.f32.mrf.mxu0
  %v1949 = vadd.f32 %v1841, %v1948
  %v1950 = vpop.f32.mrf.mxu0
  %v1951 = vadd.f32 %v1841, %v1950
  %1952 = vdwg.mxu0
  %1953 = vmatpush.bf16.msra.mxu0 %v1922
  %1954 = vmatpush.bf16.msra.mxu0 %v1921
  %1955 = vmatpush.bf16.msra.mxu0 %v1920
  %1956 = vmatpush.bf16.msra.mxu0 %v1919
  %1957 = vmatpush.bf16.msra.mxu0 %v1918
  %1958 = vmatpush.bf16.msra.mxu0 %v1917
  %1959 = vmatpush.bf16.msra.mxu0 %v1916
  %1960 = vmatpush.bf16.msra.mxu0 %v1915
  %1961 = vmatmul.bf16.gmra.mxu0 %v1806
  %v1962 = vpop.f32.mrf.mxu0
  %v1963 = vadd.f32 %v1949, %v1962
  %v1964 = vpop.f32.mrf.mxu0
  %v1965 = vadd.f32 %v1951, %v1964
  %1966 = vdwg.mxu0
  %v1967 = vadd.f32 %v1668, %v1963
  %v1968 = vadd.f32 %v1669, %v1965
  %v1969 = vld [vmem:[%s16] sm:$0x1]
  %v1970 = vld [vmem:[%s17] sm:$0x1]
  %1971 = vadd.xlane.f32.xlu0 %v1967
  %v1972 = vpop.xlane.xlu0 %1971
  %1973 = vadd.xlane.f32.xlu0 %v1968
  %v1974 = vpop.xlane.xlu0 %1973
  %v1975 = vmul.f32 %v1972, %v1623
  %v1976 = vmul.f32 %v1974, %v1623
  %v1977 = vsub.f32 %v1967, %v1975
  %v1978 = vsub.f32 %v1968, %v1976
  %v1979 = vmul.f32 %v1977, %v1977
  %v1980 = vmul.f32 %v1978, %v1978
  %1981 = vadd.xlane.f32.xlu0 %v1979
  %v1982 = vpop.xlane.xlu0 %1981
  %1983 = vadd.xlane.f32.xlu0 %v1980
  %v1984 = vpop.xlane.xlu0 %1983
  %v1985 = vmul.f32 %v1982, %v1623
  %v1986 = vmul.f32 %v1984, %v1623
  %v1987 = vadd.f32 %v1985, 1e-05
  %v1988 = vadd.f32 %v1986, 1e-05
  %v1989 = vrsqrt.pop %v1987
  %v1990 = vmul.f32 %v1989, %v1987
  %v1991 = vmul.f32 %v1990, %v1989
  %v1992 = vmul.f32 0.5, %v1991
  %v1993 = vsub.f32 1.5, %v1992
  %v1994 = vmul.f32 %v1989, %v1993
  %vm1995 = vweird.f32 %v1987
  %vm1996 = vweird.f32 %v1989
  %vm1997 = vmor %vm1995, %vm1996
  %v1998 = vsel %vm1997, %v1989, %v1994
  %v1999 = vrsqrt.pop %v1988
  %v2000 = vmul.f32 %v1999, %v1988
  %v2001 = vmul.f32 %v2000, %v1999
  %v2002 = vmul.f32 0.5, %v2001
  %v2003 = vsub.f32 1.5, %v2002
  %v2004 = vmul.f32 %v1999, %v2003
  %vm2005 = vweird.f32 %v1988
  %vm2006 = vweird.f32 %v1999
  %vm2007 = vmor %vm2005, %vm2006
  %v2008 = vsel %vm2007, %v1999, %v2004
  %v2009 = vmul.f32 %v1977, %v1998
  %v2010 = vmul.f32 %v1978, %v2008
  %v2012 = vperm.slane %v1969, 0
  %v2014 = vmul.f32 %v2009, %v2012
  %v2015 = vmul.f32 %v2010, %v2012
  %v2017 = vperm.slane %v1970, 0
  %v2019 = vadd.f32 %v2014, %v2017
  %v2020 = vadd.f32 %v2015, %v2017
  %2021 = vst [vmem:[%s18] sm:$0xff] %v2019
  %2022 = vst [vmem:[%s18 + $0x8] sm:$0xff] %v2020
  // Predicated region
  $region74: #{encoder_layer.1} parent=0 // pred_check
    _
  $region75: #{encoder_layer.1} parent=0 // pred_check_branch
    %2024 = sbr.rel (0) target = $region77
  $region76: #{encoder_layer.1} parent=0 // pred_region
    _
  $region77: #{encoder_layer.1} parent=0 // pred_fallthru
    _
  // Predicated region
  $region78: #{encoder_layer.1} parent=0 // pred_check
    _
  $region79: #{encoder_layer.1} parent=0 // pred_check_branch
    %2026 = sbr.rel (0) target = $region81
  $region80: #{encoder_layer.1} parent=0 // pred_region
    _
  $region81: #{encoder_layer.1} parent=0 // pred_fallthru
    _

</llo_original>
